<compile_context>
chip_gen: v7x
topology: tpu7x:2x2x1
jax: 0.10.0
libtpu: 0.0.40
codegen_flags: <defaults>
</compile_context>

<pallas_src>
from functools import partial

import jax
import jax.numpy as jnp
from jax.experimental import pallas as pl
from jax.experimental.pallas import tpu as pltpu


def _round_up(x, m):
    return ((x + m - 1) // m) * m


def conv_block_kernel(x_ref, w_ref, b_ref, o_ref, xpad_ref, *,
                      K, W, HW, HWp, p, lead, C_in, C_out, Nb, use_mxu, relu):
    """One grid step = Nb images.

    x_ref   : (Nb, C_in, HW)    unpadded flat images (auto-pipelined from HBM)
    w_ref   : (C_out, K*K*C_in)       if use_mxu   (im2col weight matrix)
              (K*K*C_in, C_out, 1)    otherwise    (per-tap weight columns)
    b_ref   : (C_out, 1)
    o_ref   : (Nb, C_out, HWp)  lane-dense output tiles
    xpad_ref: (Nb, C_in, L)     VMEM scratch, L = lead + HWp + p*(W+1)
    """
    L = xpad_ref.shape[-1]
    zdt = xpad_ref.dtype
    pad_flat = p * (W + 1)
    q0 = lead - pad_flat                       # lane offset of tap (kh=0, kw=0)

    # ---- Build the zero-padded flat buffer in VMEM (no HBM pad pass). -------
    if lead > 0:
        xpad_ref[:, :, :lead] = jnp.zeros((Nb, C_in, lead), zdt)
    tail = L - (lead + HW)
    if tail > 0:
        xpad_ref[:, :, lead + HW:] = jnp.zeros((Nb, C_in, tail), zdt)
    xpad_ref[:, :, lead:lead + HW] = x_ref[...].astype(zdt)   # aligned interior

    # Per-output-lane column coordinate (for masking taps that cross a row).
    col = jax.lax.broadcasted_iota(jnp.int32, (1, HWp), 1) % W
    bias = b_ref[...].astype(jnp.float32)                     # (C_out, 1)

    for n in range(Nb):                                       # static unroll
        taps = []
        acc = None if use_mxu else jnp.broadcast_to(bias, (C_out, HWp))
        # TODO(synk): for very large K*K*C_in, switch the kh loop to
        # lax.fori_loop(..., unroll=True) to bound vreg live ranges.
        for kh in range(K):
            for kw in range(K):
                dw = kw - p
                q = q0 + kh * W + kw                          # static offset
                patch = xpad_ref[n, :, q:q + HWp]             # (C_in, HWp)
                if dw != 0:
                    # Zero terms whose source column (w + dw) is out of range.
                    valid = jnp.logical_and(col + dw >= 0, col + dw < W)
                    patch = jnp.where(valid, patch, jnp.zeros_like(patch))
                if use_mxu:
                    taps.append(patch)
                else:
                    t = kh * K + kw
                    pf = patch.astype(jnp.float32)
                    for ci in range(C_in):
                        acc = acc + w_ref[t * C_in + ci] * pf[ci:ci + 1, :]
        if use_mxu:
            # Single deep contraction instead of K*K shallow depth-C_in dots.
            im2col = jnp.concatenate(taps, axis=0)            # (K*K*C_in, HWp)
            acc = jnp.dot(w_ref[...], im2col,
                          preferred_element_type=jnp.float32) + bias
        if relu:
            acc = jnp.maximum(acc, 0.0)
        o_ref[n] = acc.astype(o_ref.dtype)


def _pick_batch_block(n, per_image_bytes, target_bytes=128 << 10,
                      cap_bytes=4 << 20):
    """Largest divisor of n that keeps the per-step tile under cap_bytes,
    reaches ~target_bytes if possible, and leaves >= 2 grid steps."""
    best = 1
    for d in range(1, n + 1):
        if n % d:
            continue
        if d > 1 and d * per_image_bytes > cap_bytes:
            break
        if d > 1 and n >= 2 and n // d < 2:
            break
        best = d
        if d * per_image_bytes >= target_bytes:
            break
    return best


def conv_block(x_nchw, w_oihw, bias, *, kernel_size, linear=False,
               use_mxu=None, compute_dtype=None, batch_block=None):
    """ConvBlock.forward: Conv2d(padding=kernel_size//2) (+ ReLU unless linear)."""
    N, C_in, H, W = x_nchw.shape
    C_out = w_oihw.shape[0]
    K = kernel_size
    if K % 2 != 1:
        # TODO(synk): PyTorch Conv2d(padding=K//2) with even K changes the
        # spatial size; only the odd-K "same" case is implemented here.
        raise NotImplementedError("conv_block only supports odd kernel_size")
    p = K // 2
    HW = H * W
    HWp = _round_up(HW, 128)             # lane-dense output tile (unmasked vst)
    pad_flat = p * (W + 1)               # flat-index halo for a KxK tap window
    lead = _round_up(pad_flat, 128) if pad_flat else 0   # aligned interior copy
    L = lead + HWp + pad_flat            # padded VMEM buffer lanes per channel

    if use_mxu is None:
        # Tiny contractions waste the MXU; huge unrolls hurt the VPU path.
        use_mxu = (min(C_in, C_out) >= 32 or C_in * K * K > 128 or C_out > 128)

    x_dtype = jnp.dtype(x_nchw.dtype)
    # bf16 multiplies only make sense on the MXU path (v5e has no bf16 VALU).
    cdt = (jnp.dtype(compute_dtype)
           if (compute_dtype is not None and use_mxu) else x_dtype)

    x_flat = x_nchw.reshape(N, C_in, HW)            # free (bitcast) reshape

    # Weight / bias prep (tiny; constant-folds under jit — hoist if called hot).
    if use_mxu:
        w_arr = jnp.transpose(w_oihw, (0, 2, 3, 1)).reshape(
            C_out, K * K * C_in).astype(cdt)
        w_spec = pl.BlockSpec((C_out, K * K * C_in), lambda n: (0, 0))
    else:
        w_arr = jnp.transpose(w_oihw, (2, 3, 1, 0)).reshape(
            K * K * C_in, C_out)[..., None].astype(jnp.float32)
        w_spec = pl.BlockSpec((K * K * C_in, C_out, 1), lambda n: (0, 0, 0))
    b2 = bias.reshape(C_out, 1).astype(jnp.float32)

    # Images per grid step.
    per_image = (C_in * HW * x_dtype.itemsize
                 + C_out * HWp * x_dtype.itemsize
                 + C_in * L * jnp.dtype(cdt).itemsize)
    Nb = batch_block if batch_block is not None else _pick_batch_block(N, per_image)
    if N % Nb:
        raise ValueError("batch_block must divide the batch size")

    kern = partial(conv_block_kernel, K=K, W=W, HW=HW, HWp=HWp, p=p, lead=lead,
                   C_in=C_in, C_out=C_out, Nb=Nb, use_mxu=use_mxu,
                   relu=not linear)

    flops = 2 * N * C_out * C_in * K * K * HW + 2 * N * C_out * HW
    bytes_accessed = (x_flat.size * x_dtype.itemsize
                      + w_arr.size * w_arr.dtype.itemsize
                      + b2.size * 4
                      + N * C_out * HWp * x_dtype.itemsize)
    cost = pl.CostEstimate(flops=flops, transcendentals=0,
                           bytes_accessed=bytes_accessed)

    vmem_est = (2 * Nb * (C_in * HW + C_out * HWp) * x_dtype.itemsize
                + Nb * C_in * L * jnp.dtype(cdt).itemsize
                + (K * K * C_in * HWp * jnp.dtype(cdt).itemsize if use_mxu else 0)
                + w_arr.size * w_arr.dtype.itemsize + 4 * C_out)
    vmem_limit = int(min(max(2 * vmem_est, 16 << 20), 48 << 20))

    # TODO(synk): for very large images add a spatial (row) grid axis with a
    # p*(W+1) halo so one padded image need not be VMEM-resident (64 MiB on
    # v7x) and the pipeline gets more parallel steps.
    out = pl.pallas_call(
        kern,
        out_shape=jax.ShapeDtypeStruct((N, C_out, HWp), x_nchw.dtype),
        grid=(N // Nb,),
        in_specs=[
            pl.BlockSpec((Nb, C_in, HW), lambda n: (n, 0, 0)),
            w_spec,
            pl.BlockSpec((C_out, 1), lambda n: (0, 0)),
        ],
        out_specs=pl.BlockSpec((Nb, C_out, HWp), lambda n: (n, 0, 0)),
        scratch_shapes=[pltpu.VMEM((Nb, C_in, L), cdt)],
        compiler_params=pltpu.CompilerParams(
            dimension_semantics=("parallel",),
            vmem_limit_bytes=vmem_limit),
        cost_estimate=cost,
    )(x_flat, w_arr, b2)

    if HWp != HW:
        out = out[..., :HW]
    return out.reshape(N, C_out, H, W)               # free reshape to NCHW


if __name__ == "__main__":
    # ConvBlock(kernel_size=3, prev_layer_size=4, layer_size=8)
    kernel_size = 3
    C_in, C_out = 4, 8
    N, H, W = 2, 16, 16

    key = jax.random.PRNGKey(0)
    kx, kw_, kb, kx2, kw2, kb2 = jax.random.split(key, 6)
    x = jax.random.normal(kx, (N, C_in, H, W), jnp.float32)
    weight = jax.random.normal(kw_, (C_out, C_in, kernel_size, kernel_size),
                               jnp.float32) * 0.1
    bias = jax.random.normal(kb, (C_out,), jnp.float32) * 0.1

    def conv_ref(xv, wv, bv, k):
        pp = k // 2
        y = jax.lax.conv_general_dilated(
            xv, wv, window_strides=(1, 1), padding=((pp, pp), (pp, pp)),
            dimension_numbers=("NCHW", "OIHW", "NCHW"),
            precision=jax.lax.Precision.HIGHEST)
        return y + bv.reshape(1, -1, 1, 1)

    ref_lin = conv_ref(x, weight, bias, kernel_size)
    ref_relu = jnp.maximum(ref_lin, 0.0)

    # 1) Default path (VPU broadcast-FMA, fused bias + ReLU).
    out = jax.block_until_ready(
        conv_block(x, weight, bias, kernel_size=kernel_size, linear=False))
    assert out.shape == (N, C_out, H, W)
    assert jnp.allclose(out, ref_relu, rtol=1e-5, atol=1e-5)

    # 2) MXU im2col path (single deep contraction), linear (no ReLU).
    out_mxu = jax.block_until_ready(
        conv_block(x, weight, bias, kernel_size=kernel_size, linear=True,
                   use_mxu=True))
    assert jnp.allclose(out_mxu, ref_lin, rtol=1e-4, atol=1e-4)

    # 3) MXU path with bf16 multiplies / f32 accumulation (v6e/v7x option).
    out_bf16 = jax.block_until_ready(
        conv_block(x, weight, bias, kernel_size=kernel_size, linear=False,
                   use_mxu=True, compute_dtype=jnp.bfloat16))
    assert jnp.allclose(out_bf16, ref_relu, rtol=5e-2, atol=5e-2)

    # 4) Multi-image blocks + non-128-multiple H*W + K=5 (generic shapes).
    K2, N2, C_in2, C_out2, H2, W2 = 5, 4, 3, 5, 12, 12
    x2 = jax.random.normal(kx2, (N2, C_in2, H2, W2), jnp.float32)
    weight2 = jax.random.normal(kw2, (C_out2, C_in2, K2, K2), jnp.float32) * 0.1
    bias2 = jax.random.normal(kb2, (C_out2,), jnp.float32) * 0.1
    ref2 = jnp.maximum(conv_ref(x2, weight2, bias2, K2), 0.0)
    out2 = jax.block_until_ready(
        conv_block(x2, weight2, bias2, kernel_size=K2))
    assert out2.shape == (N2, C_out2, H2, W2)
    assert jnp.allclose(out2, ref2, rtol=1e-4, atol=1e-4)

    print("KERNEL_OK")
</pallas_src>

<mosaic_0001>
module attributes {stable_mosaic.version = 11 : i64} {
  func.func @conv_block_kernel(%arg0: i32, %arg1: memref<1x4x256xf32, #tpu.memory_space<vmem>>, %arg2: memref<36x8x1xf32, #tpu.memory_space<vmem>>, %arg3: memref<8x1xf32, #tpu.memory_space<vmem>>, %arg4: memref<1x8x256xf32, #tpu.memory_space<vmem>>, %arg5: memref<1x4x401xf32, #tpu.memory_space<vmem>>) attributes {dimension_semantics = [#tpu.dimension_semantics<parallel>], iteration_bounds = array<i64: 2>, scalar_prefetch = 0 : i64, scratch_operands = 1 : i64, tpu.core_type = #tpu.core_type<tc>, window_params = [{transform_indices = @transform_0, window_bounds = array<i64: 1, 4, 256>}, {pipeline_mode = #tpu.pipeline_mode<synchronous>, transform_indices = @transform_1, window_bounds = array<i64: 36, 8, 1>}, {pipeline_mode = #tpu.pipeline_mode<synchronous>, transform_indices = @transform_2, window_bounds = array<i64: 8, 1>}, {transform_indices = @transform_3, window_bounds = array<i64: 1, 8, 256>}]} {
    %cst = arith.constant 0.000000e+00 : f32
    %0 = vector.broadcast %cst : f32 to vector<1x4x128xf32>
    %c0 = arith.constant 0 : index
    %c0_0 = arith.constant 0 : index
    %c0_1 = arith.constant 0 : index
    %1 = vector.load %arg5[%c0, %c0_0, %c0_1] : memref<1x4x401xf32, #tpu.memory_space<vmem>>, vector<1x4x128xf32>
    tpu.vector_store %arg5[%c0, %c0_0, %c0_1], %0 {strides = array<i32>} : memref<1x4x401xf32, #tpu.memory_space<vmem>>, vector<1x4x128xf32>,
    %cst_2 = arith.constant 0.000000e+00 : f32
    %2 = vector.broadcast %cst_2 : f32 to vector<1x4x17xf32>
    %c0_3 = arith.constant 0 : index
    %c0_4 = arith.constant 0 : index
    %c384 = arith.constant 384 : index
    %3 = vector.load %arg5[%c0_3, %c0_4, %c384] : memref<1x4x401xf32, #tpu.memory_space<vmem>>, vector<1x4x17xf32>
    tpu.vector_store %arg5[%c0_3, %c0_4, %c384], %2 {strides = array<i32>} : memref<1x4x401xf32, #tpu.memory_space<vmem>>, vector<1x4x17xf32>,
    %c0_5 = arith.constant 0 : index
    %c0_6 = arith.constant 0 : index
    %c0_7 = arith.constant 0 : index
    %4 = vector.load %arg1[%c0_5, %c0_6, %c0_7] : memref<1x4x256xf32, #tpu.memory_space<vmem>>, vector<1x4x256xf32>
    %c0_8 = arith.constant 0 : index
    %c0_9 = arith.constant 0 : index
    %c128 = arith.constant 128 : index
    %5 = vector.load %arg5[%c0_8, %c0_9, %c128] : memref<1x4x401xf32, #tpu.memory_space<vmem>>, vector<1x4x256xf32>
    tpu.vector_store %arg5[%c0_8, %c0_9, %c128], %4 {strides = array<i32>} : memref<1x4x401xf32, #tpu.memory_space<vmem>>, vector<1x4x256xf32>,
    %6 = tpu.iota {dimensions = array<i32: 1>} : vector<1x256xi32>
    %c16_i32 = arith.constant 16 : i32
    %c0_i32 = arith.constant 0 : i32
    %7 = arith.cmpi eq, %c16_i32, %c0_i32 : i32
    %c1_i32 = arith.constant 1 : i32
    %8 = arith.select %7, %c1_i32, %c16_i32 : i32
    %9 = vector.broadcast %8 : i32 to vector<1x256xi32>
    %10 = arith.remsi %6, %9 : vector<1x256xi32>
    %c0_i32_10 = arith.constant 0 : i32
    %11 = vector.broadcast %c0_i32_10 : i32 to vector<1x256xi32>
    %12 = arith.cmpi ne, %10, %11 : vector<1x256xi32>
    %c0_i32_11 = arith.constant 0 : i32
    %13 = vector.broadcast %c0_i32_11 : i32 to vector<1x256xi32>
    %14 = arith.cmpi slt, %10, %13 : vector<1x256xi32>
    %c0_i32_12 = arith.constant 0 : i32
    %15 = arith.cmpi slt, %8, %c0_i32_12 : i32
    %16 = vector.broadcast %15 : i1 to vector<1x256xi1>
    %17 = vector.broadcast %16 : vector<1x256xi1> to vector<1x256xi1>
    %18 = arith.xori %14, %17 : vector<1x256xi1>
    %19 = arith.andi %18, %12 : vector<1x256xi1>
    %20 = vector.broadcast %8 : i32 to vector<1x256xi32>
    %21 = arith.addi %10, %20 : vector<1x256xi32>
    %22 = arith.select %19, %21, %10 : vector<1x256xi1>, vector<1x256xi32>
    %c0_13 = arith.constant 0 : index
    %c0_14 = arith.constant 0 : index
    %23 = vector.load %arg3[%c0_13, %c0_14] : memref<8x1xf32, #tpu.memory_space<vmem>>, vector<8x1xf32>
    %24 = vector.shape_cast %23 : vector<8x1xf32> to vector<8x1xf32>
    %25 = vector.broadcast %24 : vector<8x1xf32> to vector<8x256xf32>
    %c0_15 = arith.constant 0 : index
    %c0_16 = arith.constant 0 : index
    %c111 = arith.constant 111 : index
    %26 = vector.load %arg5[%c0_15, %c0_16, %c111] : memref<1x4x401xf32, #tpu.memory_space<vmem>>, vector<1x4x256xf32>
    %27 = vector.shape_cast %26 : vector<1x4x256xf32> to vector<4x256xf32>
    %c-1_i32 = arith.constant -1 : i32
    %28 = vector.broadcast %c-1_i32 : i32 to vector<1x256xi32>
    %29 = arith.addi %22, %28 : vector<1x256xi32>
    %c0_i32_17 = arith.constant 0 : i32
    %30 = vector.broadcast %c0_i32_17 : i32 to vector<1x256xi32>
    %31 = arith.cmpi sge, %29, %30 : vector<1x256xi32>
    %c-1_i32_18 = arith.constant -1 : i32
    %32 = vector.broadcast %c-1_i32_18 : i32 to vector<1x256xi32>
    %33 = arith.addi %22, %32 : vector<1x256xi32>
    %c16_i32_19 = arith.constant 16 : i32
    %34 = vector.broadcast %c16_i32_19 : i32 to vector<1x256xi32>
    %35 = arith.cmpi slt, %33, %34 : vector<1x256xi32>
    %36 = arith.andi %31, %35 : vector<1x256xi1>
    %cst_20 = arith.constant 0.000000e+00 : f32
    %37 = vector.broadcast %cst_20 : f32 to vector<4x256xf32>
    %38 = vector.shape_cast %36 : vector<1x256xi1> to vector<1x256xi1>
    %39 = vector.broadcast %38 : vector<1x256xi1> to vector<4x256xi1>
    %40 = arith.select %39, %27, %37 : vector<4x256xi1>, vector<4x256xf32>
    %c0_21 = arith.constant 0 : index
    %c0_22 = arith.constant 0 : index
    %c0_23 = arith.constant 0 : index
    %41 = vector.load %arg2[%c0_21, %c0_22, %c0_23] : memref<36x8x1xf32, #tpu.memory_space<vmem>>, vector<1x8x1xf32>
    %42 = vector.shape_cast %41 : vector<1x8x1xf32> to vector<8x1xf32>
    %43 = vector.extract_strided_slice %40 {offsets = [0, 0], sizes = [1, 256], strides = [1, 1]} : vector<4x256xf32> to vector<1x256xf32>
    %44 = vector.broadcast %42 : vector<8x1xf32> to vector<8x256xf32>
    %45 = vector.broadcast %43 : vector<1x256xf32> to vector<8x256xf32>
    %46 = arith.mulf %44, %45 : vector<8x256xf32>
    %47 = arith.addf %25, %46 : vector<8x256xf32>
    %c1 = arith.constant 1 : index
    %c0_24 = arith.constant 0 : index
    %c0_25 = arith.constant 0 : index
    %48 = vector.load %arg2[%c1, %c0_24, %c0_25] : memref<36x8x1xf32, #tpu.memory_space<vmem>>, vector<1x8x1xf32>
    %49 = vector.shape_cast %48 : vector<1x8x1xf32> to vector<8x1xf32>
    %50 = vector.extract_strided_slice %40 {offsets = [1, 0], sizes = [1, 256], strides = [1, 1]} : vector<4x256xf32> to vector<1x256xf32>
    %51 = vector.broadcast %49 : vector<8x1xf32> to vector<8x256xf32>
    %52 = vector.broadcast %50 : vector<1x256xf32> to vector<8x256xf32>
    %53 = arith.mulf %51, %52 : vector<8x256xf32>
    %54 = arith.addf %47, %53 : vector<8x256xf32>
    %c2 = arith.constant 2 : index
    %c0_26 = arith.constant 0 : index
    %c0_27 = arith.constant 0 : index
    %55 = vector.load %arg2[%c2, %c0_26, %c0_27] : memref<36x8x1xf32, #tpu.memory_space<vmem>>, vector<1x8x1xf32>
    %56 = vector.shape_cast %55 : vector<1x8x1xf32> to vector<8x1xf32>
    %57 = vector.extract_strided_slice %40 {offsets = [2, 0], sizes = [1, 256], strides = [1, 1]} : vector<4x256xf32> to vector<1x256xf32>
    %58 = vector.broadcast %56 : vector<8x1xf32> to vector<8x256xf32>
    %59 = vector.broadcast %57 : vector<1x256xf32> to vector<8x256xf32>
    %60 = arith.mulf %58, %59 : vector<8x256xf32>
    %61 = arith.addf %54, %60 : vector<8x256xf32>
    %c3 = arith.constant 3 : index
    %c0_28 = arith.constant 0 : index
    %c0_29 = arith.constant 0 : index
    %62 = vector.load %arg2[%c3, %c0_28, %c0_29] : memref<36x8x1xf32, #tpu.memory_space<vmem>>, vector<1x8x1xf32>
    %63 = vector.shape_cast %62 : vector<1x8x1xf32> to vector<8x1xf32>
    %64 = vector.extract_strided_slice %40 {offsets = [3, 0], sizes = [1, 256], strides = [1, 1]} : vector<4x256xf32> to vector<1x256xf32>
    %65 = vector.broadcast %63 : vector<8x1xf32> to vector<8x256xf32>
    %66 = vector.broadcast %64 : vector<1x256xf32> to vector<8x256xf32>
    %67 = arith.mulf %65, %66 : vector<8x256xf32>
    %68 = arith.addf %61, %67 : vector<8x256xf32>
    %c0_30 = arith.constant 0 : index
    %c0_31 = arith.constant 0 : index
    %c112 = arith.constant 112 : index
    %69 = vector.load %arg5[%c0_30, %c0_31, %c112] : memref<1x4x401xf32, #tpu.memory_space<vmem>>, vector<1x4x256xf32>
    %70 = vector.shape_cast %69 : vector<1x4x256xf32> to vector<4x256xf32>
    %c4 = arith.constant 4 : index
    %c0_32 = arith.constant 0 : index
    %c0_33 = arith.constant 0 : index
    %71 = vector.load %arg2[%c4, %c0_32, %c0_33] : memref<36x8x1xf32, #tpu.memory_space<vmem>>, vector<1x8x1xf32>
    %72 = vector.shape_cast %71 : vector<1x8x1xf32> to vector<8x1xf32>
    %73 = vector.extract_strided_slice %70 {offsets = [0, 0], sizes = [1, 256], strides = [1, 1]} : vector<4x256xf32> to vector<1x256xf32>
    %74 = vector.broadcast %72 : vector<8x1xf32> to vector<8x256xf32>
    %75 = vector.broadcast %73 : vector<1x256xf32> to vector<8x256xf32>
    %76 = arith.mulf %74, %75 : vector<8x256xf32>
    %77 = arith.addf %68, %76 : vector<8x256xf32>
    %c5 = arith.constant 5 : index
    %c0_34 = arith.constant 0 : index
    %c0_35 = arith.constant 0 : index
    %78 = vector.load %arg2[%c5, %c0_34, %c0_35] : memref<36x8x1xf32, #tpu.memory_space<vmem>>, vector<1x8x1xf32>
    %79 = vector.shape_cast %78 : vector<1x8x1xf32> to vector<8x1xf32>
    %80 = vector.extract_strided_slice %70 {offsets = [1, 0], sizes = [1, 256], strides = [1, 1]} : vector<4x256xf32> to vector<1x256xf32>
    %81 = vector.broadcast %79 : vector<8x1xf32> to vector<8x256xf32>
    %82 = vector.broadcast %80 : vector<1x256xf32> to vector<8x256xf32>
    %83 = arith.mulf %81, %82 : vector<8x256xf32>
    %84 = arith.addf %77, %83 : vector<8x256xf32>
    %c6 = arith.constant 6 : index
    %c0_36 = arith.constant 0 : index
    %c0_37 = arith.constant 0 : index
    %85 = vector.load %arg2[%c6, %c0_36, %c0_37] : memref<36x8x1xf32, #tpu.memory_space<vmem>>, vector<1x8x1xf32>
    %86 = vector.shape_cast %85 : vector<1x8x1xf32> to vector<8x1xf32>
    %87 = vector.extract_strided_slice %70 {offsets = [2, 0], sizes = [1, 256], strides = [1, 1]} : vector<4x256xf32> to vector<1x256xf32>
    %88 = vector.broadcast %86 : vector<8x1xf32> to vector<8x256xf32>
    %89 = vector.broadcast %87 : vector<1x256xf32> to vector<8x256xf32>
    %90 = arith.mulf %88, %89 : vector<8x256xf32>
    %91 = arith.addf %84, %90 : vector<8x256xf32>
    %c7 = arith.constant 7 : index
    %c0_38 = arith.constant 0 : index
    %c0_39 = arith.constant 0 : index
    %92 = vector.load %arg2[%c7, %c0_38, %c0_39] : memref<36x8x1xf32, #tpu.memory_space<vmem>>, vector<1x8x1xf32>
    %93 = vector.shape_cast %92 : vector<1x8x1xf32> to vector<8x1xf32>
    %94 = vector.extract_strided_slice %70 {offsets = [3, 0], sizes = [1, 256], strides = [1, 1]} : vector<4x256xf32> to vector<1x256xf32>
    %95 = vector.broadcast %93 : vector<8x1xf32> to vector<8x256xf32>
    %96 = vector.broadcast %94 : vector<1x256xf32> to vector<8x256xf32>
    %97 = arith.mulf %95, %96 : vector<8x256xf32>
    %98 = arith.addf %91, %97 : vector<8x256xf32>
    %c0_40 = arith.constant 0 : index
    %c0_41 = arith.constant 0 : index
    %c113 = arith.constant 113 : index
    %99 = vector.load %arg5[%c0_40, %c0_41, %c113] : memref<1x4x401xf32, #tpu.memory_space<vmem>>, vector<1x4x256xf32>
    %100 = vector.shape_cast %99 : vector<1x4x256xf32> to vector<4x256xf32>
    %c1_i32_42 = arith.constant 1 : i32
    %101 = vector.broadcast %c1_i32_42 : i32 to vector<1x256xi32>
    %102 = arith.addi %22, %101 : vector<1x256xi32>
    %c0_i32_43 = arith.constant 0 : i32
    %103 = vector.broadcast %c0_i32_43 : i32 to vector<1x256xi32>
    %104 = arith.cmpi sge, %102, %103 : vector<1x256xi32>
    %c1_i32_44 = arith.constant 1 : i32
    %105 = vector.broadcast %c1_i32_44 : i32 to vector<1x256xi32>
    %106 = arith.addi %22, %105 : vector<1x256xi32>
    %c16_i32_45 = arith.constant 16 : i32
    %107 = vector.broadcast %c16_i32_45 : i32 to vector<1x256xi32>
    %108 = arith.cmpi slt, %106, %107 : vector<1x256xi32>
    %109 = arith.andi %104, %108 : vector<1x256xi1>
    %cst_46 = arith.constant 0.000000e+00 : f32
    %110 = vector.broadcast %cst_46 : f32 to vector<4x256xf32>
    %111 = vector.shape_cast %109 : vector<1x256xi1> to vector<1x256xi1>
    %112 = vector.broadcast %111 : vector<1x256xi1> to vector<4x256xi1>
    %113 = arith.select %112, %100, %110 : vector<4x256xi1>, vector<4x256xf32>
    %c8 = arith.constant 8 : index
    %c0_47 = arith.constant 0 : index
    %c0_48 = arith.constant 0 : index
    %114 = vector.load %arg2[%c8, %c0_47, %c0_48] : memref<36x8x1xf32, #tpu.memory_space<vmem>>, vector<1x8x1xf32>
    %115 = vector.shape_cast %114 : vector<1x8x1xf32> to vector<8x1xf32>
    %116 = vector.extract_strided_slice %113 {offsets = [0, 0], sizes = [1, 256], strides = [1, 1]} : vector<4x256xf32> to vector<1x256xf32>
    %117 = vector.broadcast %115 : vector<8x1xf32> to vector<8x256xf32>
    %118 = vector.broadcast %116 : vector<1x256xf32> to vector<8x256xf32>
    %119 = arith.mulf %117, %118 : vector<8x256xf32>
    %120 = arith.addf %98, %119 : vector<8x256xf32>
    %c9 = arith.constant 9 : index
    %c0_49 = arith.constant 0 : index
    %c0_50 = arith.constant 0 : index
    %121 = vector.load %arg2[%c9, %c0_49, %c0_50] : memref<36x8x1xf32, #tpu.memory_space<vmem>>, vector<1x8x1xf32>
    %122 = vector.shape_cast %121 : vector<1x8x1xf32> to vector<8x1xf32>
    %123 = vector.extract_strided_slice %113 {offsets = [1, 0], sizes = [1, 256], strides = [1, 1]} : vector<4x256xf32> to vector<1x256xf32>
    %124 = vector.broadcast %122 : vector<8x1xf32> to vector<8x256xf32>
    %125 = vector.broadcast %123 : vector<1x256xf32> to vector<8x256xf32>
    %126 = arith.mulf %124, %125 : vector<8x256xf32>
    %127 = arith.addf %120, %126 : vector<8x256xf32>
    %c10 = arith.constant 10 : index
    %c0_51 = arith.constant 0 : index
    %c0_52 = arith.constant 0 : index
    %128 = vector.load %arg2[%c10, %c0_51, %c0_52] : memref<36x8x1xf32, #tpu.memory_space<vmem>>, vector<1x8x1xf32>
    %129 = vector.shape_cast %128 : vector<1x8x1xf32> to vector<8x1xf32>
    %130 = vector.extract_strided_slice %113 {offsets = [2, 0], sizes = [1, 256], strides = [1, 1]} : vector<4x256xf32> to vector<1x256xf32>
    %131 = vector.broadcast %129 : vector<8x1xf32> to vector<8x256xf32>
    %132 = vector.broadcast %130 : vector<1x256xf32> to vector<8x256xf32>
    %133 = arith.mulf %131, %132 : vector<8x256xf32>
    %134 = arith.addf %127, %133 : vector<8x256xf32>
    %c11 = arith.constant 11 : index
    %c0_53 = arith.constant 0 : index
    %c0_54 = arith.constant 0 : index
    %135 = vector.load %arg2[%c11, %c0_53, %c0_54] : memref<36x8x1xf32, #tpu.memory_space<vmem>>, vector<1x8x1xf32>
    %136 = vector.shape_cast %135 : vector<1x8x1xf32> to vector<8x1xf32>
    %137 = vector.extract_strided_slice %113 {offsets = [3, 0], sizes = [1, 256], strides = [1, 1]} : vector<4x256xf32> to vector<1x256xf32>
    %138 = vector.broadcast %136 : vector<8x1xf32> to vector<8x256xf32>
    %139 = vector.broadcast %137 : vector<1x256xf32> to vector<8x256xf32>
    %140 = arith.mulf %138, %139 : vector<8x256xf32>
    %141 = arith.addf %134, %140 : vector<8x256xf32>
    %c0_55 = arith.constant 0 : index
    %c0_56 = arith.constant 0 : index
    %c127 = arith.constant 127 : index
    %142 = vector.load %arg5[%c0_55, %c0_56, %c127] : memref<1x4x401xf32, #tpu.memory_space<vmem>>, vector<1x4x256xf32>
    %143 = vector.shape_cast %142 : vector<1x4x256xf32> to vector<4x256xf32>
    %c-1_i32_57 = arith.constant -1 : i32
    %144 = vector.broadcast %c-1_i32_57 : i32 to vector<1x256xi32>
    %145 = arith.addi %22, %144 : vector<1x256xi32>
    %c0_i32_58 = arith.constant 0 : i32
    %146 = vector.broadcast %c0_i32_58 : i32 to vector<1x256xi32>
    %147 = arith.cmpi sge, %145, %146 : vector<1x256xi32>
    %c-1_i32_59 = arith.constant -1 : i32
    %148 = vector.broadcast %c-1_i32_59 : i32 to vector<1x256xi32>
    %149 = arith.addi %22, %148 : vector<1x256xi32>
    %c16_i32_60 = arith.constant 16 : i32
    %150 = vector.broadcast %c16_i32_60 : i32 to vector<1x256xi32>
    %151 = arith.cmpi slt, %149, %150 : vector<1x256xi32>
    %152 = arith.andi %147, %151 : vector<1x256xi1>
    %cst_61 = arith.constant 0.000000e+00 : f32
    %153 = vector.broadcast %cst_61 : f32 to vector<4x256xf32>
    %154 = vector.shape_cast %152 : vector<1x256xi1> to vector<1x256xi1>
    %155 = vector.broadcast %154 : vector<1x256xi1> to vector<4x256xi1>
    %156 = arith.select %155, %143, %153 : vector<4x256xi1>, vector<4x256xf32>
    %c12 = arith.constant 12 : index
    %c0_62 = arith.constant 0 : index
    %c0_63 = arith.constant 0 : index
    %157 = vector.load %arg2[%c12, %c0_62, %c0_63] : memref<36x8x1xf32, #tpu.memory_space<vmem>>, vector<1x8x1xf32>
    %158 = vector.shape_cast %157 : vector<1x8x1xf32> to vector<8x1xf32>
    %159 = vector.extract_strided_slice %156 {offsets = [0, 0], sizes = [1, 256], strides = [1, 1]} : vector<4x256xf32> to vector<1x256xf32>
    %160 = vector.broadcast %158 : vector<8x1xf32> to vector<8x256xf32>
    %161 = vector.broadcast %159 : vector<1x256xf32> to vector<8x256xf32>
    %162 = arith.mulf %160, %161 : vector<8x256xf32>
    %163 = arith.addf %141, %162 : vector<8x256xf32>
    %c13 = arith.constant 13 : index
    %c0_64 = arith.constant 0 : index
    %c0_65 = arith.constant 0 : index
    %164 = vector.load %arg2[%c13, %c0_64, %c0_65] : memref<36x8x1xf32, #tpu.memory_space<vmem>>, vector<1x8x1xf32>
    %165 = vector.shape_cast %164 : vector<1x8x1xf32> to vector<8x1xf32>
    %166 = vector.extract_strided_slice %156 {offsets = [1, 0], sizes = [1, 256], strides = [1, 1]} : vector<4x256xf32> to vector<1x256xf32>
    %167 = vector.broadcast %165 : vector<8x1xf32> to vector<8x256xf32>
    %168 = vector.broadcast %166 : vector<1x256xf32> to vector<8x256xf32>
    %169 = arith.mulf %167, %168 : vector<8x256xf32>
    %170 = arith.addf %163, %169 : vector<8x256xf32>
    %c14 = arith.constant 14 : index
    %c0_66 = arith.constant 0 : index
    %c0_67 = arith.constant 0 : index
    %171 = vector.load %arg2[%c14, %c0_66, %c0_67] : memref<36x8x1xf32, #tpu.memory_space<vmem>>, vector<1x8x1xf32>
    %172 = vector.shape_cast %171 : vector<1x8x1xf32> to vector<8x1xf32>
    %173 = vector.extract_strided_slice %156 {offsets = [2, 0], sizes = [1, 256], strides = [1, 1]} : vector<4x256xf32> to vector<1x256xf32>
    %174 = vector.broadcast %172 : vector<8x1xf32> to vector<8x256xf32>
    %175 = vector.broadcast %173 : vector<1x256xf32> to vector<8x256xf32>
    %176 = arith.mulf %174, %175 : vector<8x256xf32>
    %177 = arith.addf %170, %176 : vector<8x256xf32>
    %c15 = arith.constant 15 : index
    %c0_68 = arith.constant 0 : index
    %c0_69 = arith.constant 0 : index
    %178 = vector.load %arg2[%c15, %c0_68, %c0_69] : memref<36x8x1xf32, #tpu.memory_space<vmem>>, vector<1x8x1xf32>
    %179 = vector.shape_cast %178 : vector<1x8x1xf32> to vector<8x1xf32>
    %180 = vector.extract_strided_slice %156 {offsets = [3, 0], sizes = [1, 256], strides = [1, 1]} : vector<4x256xf32> to vector<1x256xf32>
    %181 = vector.broadcast %179 : vector<8x1xf32> to vector<8x256xf32>
    %182 = vector.broadcast %180 : vector<1x256xf32> to vector<8x256xf32>
    %183 = arith.mulf %181, %182 : vector<8x256xf32>
    %184 = arith.addf %177, %183 : vector<8x256xf32>
    %c0_70 = arith.constant 0 : index
    %c0_71 = arith.constant 0 : index
    %c128_72 = arith.constant 128 : index
    %185 = vector.load %arg5[%c0_70, %c0_71, %c128_72] : memref<1x4x401xf32, #tpu.memory_space<vmem>>, vector<1x4x256xf32>
    %186 = vector.shape_cast %185 : vector<1x4x256xf32> to vector<4x256xf32>
    %c16 = arith.constant 16 : index
    %c0_73 = arith.constant 0 : index
    %c0_74 = arith.constant 0 : index
    %187 = vector.load %arg2[%c16, %c0_73, %c0_74] : memref<36x8x1xf32, #tpu.memory_space<vmem>>, vector<1x8x1xf32>
    %188 = vector.shape_cast %187 : vector<1x8x1xf32> to vector<8x1xf32>
    %189 = vector.extract_strided_slice %186 {offsets = [0, 0], sizes = [1, 256], strides = [1, 1]} : vector<4x256xf32> to vector<1x256xf32>
    %190 = vector.broadcast %188 : vector<8x1xf32> to vector<8x256xf32>
    %191 = vector.broadcast %189 : vector<1x256xf32> to vector<8x256xf32>
    %192 = arith.mulf %190, %191 : vector<8x256xf32>
    %193 = arith.addf %184, %192 : vector<8x256xf32>
    %c17 = arith.constant 17 : index
    %c0_75 = arith.constant 0 : index
    %c0_76 = arith.constant 0 : index
    %194 = vector.load %arg2[%c17, %c0_75, %c0_76] : memref<36x8x1xf32, #tpu.memory_space<vmem>>, vector<1x8x1xf32>
    %195 = vector.shape_cast %194 : vector<1x8x1xf32> to vector<8x1xf32>
    %196 = vector.extract_strided_slice %186 {offsets = [1, 0], sizes = [1, 256], strides = [1, 1]} : vector<4x256xf32> to vector<1x256xf32>
    %197 = vector.broadcast %195 : vector<8x1xf32> to vector<8x256xf32>
    %198 = vector.broadcast %196 : vector<1x256xf32> to vector<8x256xf32>
    %199 = arith.mulf %197, %198 : vector<8x256xf32>
    %200 = arith.addf %193, %199 : vector<8x256xf32>
    %c18 = arith.constant 18 : index
    %c0_77 = arith.constant 0 : index
    %c0_78 = arith.constant 0 : index
    %201 = vector.load %arg2[%c18, %c0_77, %c0_78] : memref<36x8x1xf32, #tpu.memory_space<vmem>>, vector<1x8x1xf32>
    %202 = vector.shape_cast %201 : vector<1x8x1xf32> to vector<8x1xf32>
    %203 = vector.extract_strided_slice %186 {offsets = [2, 0], sizes = [1, 256], strides = [1, 1]} : vector<4x256xf32> to vector<1x256xf32>
    %204 = vector.broadcast %202 : vector<8x1xf32> to vector<8x256xf32>
    %205 = vector.broadcast %203 : vector<1x256xf32> to vector<8x256xf32>
    %206 = arith.mulf %204, %205 : vector<8x256xf32>
    %207 = arith.addf %200, %206 : vector<8x256xf32>
    %c19 = arith.constant 19 : index
    %c0_79 = arith.constant 0 : index
    %c0_80 = arith.constant 0 : index
    %208 = vector.load %arg2[%c19, %c0_79, %c0_80] : memref<36x8x1xf32, #tpu.memory_space<vmem>>, vector<1x8x1xf32>
    %209 = vector.shape_cast %208 : vector<1x8x1xf32> to vector<8x1xf32>
    %210 = vector.extract_strided_slice %186 {offsets = [3, 0], sizes = [1, 256], strides = [1, 1]} : vector<4x256xf32> to vector<1x256xf32>
    %211 = vector.broadcast %209 : vector<8x1xf32> to vector<8x256xf32>
    %212 = vector.broadcast %210 : vector<1x256xf32> to vector<8x256xf32>
    %213 = arith.mulf %211, %212 : vector<8x256xf32>
    %214 = arith.addf %207, %213 : vector<8x256xf32>
    %c0_81 = arith.constant 0 : index
    %c0_82 = arith.constant 0 : index
    %c129 = arith.constant 129 : index
    %215 = vector.load %arg5[%c0_81, %c0_82, %c129] : memref<1x4x401xf32, #tpu.memory_space<vmem>>, vector<1x4x256xf32>
    %216 = vector.shape_cast %215 : vector<1x4x256xf32> to vector<4x256xf32>
    %c1_i32_83 = arith.constant 1 : i32
    %217 = vector.broadcast %c1_i32_83 : i32 to vector<1x256xi32>
    %218 = arith.addi %22, %217 : vector<1x256xi32>
    %c0_i32_84 = arith.constant 0 : i32
    %219 = vector.broadcast %c0_i32_84 : i32 to vector<1x256xi32>
    %220 = arith.cmpi sge, %218, %219 : vector<1x256xi32>
    %c1_i32_85 = arith.constant 1 : i32
    %221 = vector.broadcast %c1_i32_85 : i32 to vector<1x256xi32>
    %222 = arith.addi %22, %221 : vector<1x256xi32>
    %c16_i32_86 = arith.constant 16 : i32
    %223 = vector.broadcast %c16_i32_86 : i32 to vector<1x256xi32>
    %224 = arith.cmpi slt, %222, %223 : vector<1x256xi32>
    %225 = arith.andi %220, %224 : vector<1x256xi1>
    %cst_87 = arith.constant 0.000000e+00 : f32
    %226 = vector.broadcast %cst_87 : f32 to vector<4x256xf32>
    %227 = vector.shape_cast %225 : vector<1x256xi1> to vector<1x256xi1>
    %228 = vector.broadcast %227 : vector<1x256xi1> to vector<4x256xi1>
    %229 = arith.select %228, %216, %226 : vector<4x256xi1>, vector<4x256xf32>
    %c20 = arith.constant 20 : index
    %c0_88 = arith.constant 0 : index
    %c0_89 = arith.constant 0 : index
    %230 = vector.load %arg2[%c20, %c0_88, %c0_89] : memref<36x8x1xf32, #tpu.memory_space<vmem>>, vector<1x8x1xf32>
    %231 = vector.shape_cast %230 : vector<1x8x1xf32> to vector<8x1xf32>
    %232 = vector.extract_strided_slice %229 {offsets = [0, 0], sizes = [1, 256], strides = [1, 1]} : vector<4x256xf32> to vector<1x256xf32>
    %233 = vector.broadcast %231 : vector<8x1xf32> to vector<8x256xf32>
    %234 = vector.broadcast %232 : vector<1x256xf32> to vector<8x256xf32>
    %235 = arith.mulf %233, %234 : vector<8x256xf32>
    %236 = arith.addf %214, %235 : vector<8x256xf32>
    %c21 = arith.constant 21 : index
    %c0_90 = arith.constant 0 : index
    %c0_91 = arith.constant 0 : index
    %237 = vector.load %arg2[%c21, %c0_90, %c0_91] : memref<36x8x1xf32, #tpu.memory_space<vmem>>, vector<1x8x1xf32>
    %238 = vector.shape_cast %237 : vector<1x8x1xf32> to vector<8x1xf32>
    %239 = vector.extract_strided_slice %229 {offsets = [1, 0], sizes = [1, 256], strides = [1, 1]} : vector<4x256xf32> to vector<1x256xf32>
    %240 = vector.broadcast %238 : vector<8x1xf32> to vector<8x256xf32>
    %241 = vector.broadcast %239 : vector<1x256xf32> to vector<8x256xf32>
    %242 = arith.mulf %240, %241 : vector<8x256xf32>
    %243 = arith.addf %236, %242 : vector<8x256xf32>
    %c22 = arith.constant 22 : index
    %c0_92 = arith.constant 0 : index
    %c0_93 = arith.constant 0 : index
    %244 = vector.load %arg2[%c22, %c0_92, %c0_93] : memref<36x8x1xf32, #tpu.memory_space<vmem>>, vector<1x8x1xf32>
    %245 = vector.shape_cast %244 : vector<1x8x1xf32> to vector<8x1xf32>
    %246 = vector.extract_strided_slice %229 {offsets = [2, 0], sizes = [1, 256], strides = [1, 1]} : vector<4x256xf32> to vector<1x256xf32>
    %247 = vector.broadcast %245 : vector<8x1xf32> to vector<8x256xf32>
    %248 = vector.broadcast %246 : vector<1x256xf32> to vector<8x256xf32>
    %249 = arith.mulf %247, %248 : vector<8x256xf32>
    %250 = arith.addf %243, %249 : vector<8x256xf32>
    %c23 = arith.constant 23 : index
    %c0_94 = arith.constant 0 : index
    %c0_95 = arith.constant 0 : index
    %251 = vector.load %arg2[%c23, %c0_94, %c0_95] : memref<36x8x1xf32, #tpu.memory_space<vmem>>, vector<1x8x1xf32>
    %252 = vector.shape_cast %251 : vector<1x8x1xf32> to vector<8x1xf32>
    %253 = vector.extract_strided_slice %229 {offsets = [3, 0], sizes = [1, 256], strides = [1, 1]} : vector<4x256xf32> to vector<1x256xf32>
    %254 = vector.broadcast %252 : vector<8x1xf32> to vector<8x256xf32>
    %255 = vector.broadcast %253 : vector<1x256xf32> to vector<8x256xf32>
    %256 = arith.mulf %254, %255 : vector<8x256xf32>
    %257 = arith.addf %250, %256 : vector<8x256xf32>
    %c0_96 = arith.constant 0 : index
    %c0_97 = arith.constant 0 : index
    %c143 = arith.constant 143 : index
    %258 = vector.load %arg5[%c0_96, %c0_97, %c143] : memref<1x4x401xf32, #tpu.memory_space<vmem>>, vector<1x4x256xf32>
    %259 = vector.shape_cast %258 : vector<1x4x256xf32> to vector<4x256xf32>
    %c-1_i32_98 = arith.constant -1 : i32
    %260 = vector.broadcast %c-1_i32_98 : i32 to vector<1x256xi32>
    %261 = arith.addi %22, %260 : vector<1x256xi32>
    %c0_i32_99 = arith.constant 0 : i32
    %262 = vector.broadcast %c0_i32_99 : i32 to vector<1x256xi32>
    %263 = arith.cmpi sge, %261, %262 : vector<1x256xi32>
    %c-1_i32_100 = arith.constant -1 : i32
    %264 = vector.broadcast %c-1_i32_100 : i32 to vector<1x256xi32>
    %265 = arith.addi %22, %264 : vector<1x256xi32>
    %c16_i32_101 = arith.constant 16 : i32
    %266 = vector.broadcast %c16_i32_101 : i32 to vector<1x256xi32>
    %267 = arith.cmpi slt, %265, %266 : vector<1x256xi32>
    %268 = arith.andi %263, %267 : vector<1x256xi1>
    %cst_102 = arith.constant 0.000000e+00 : f32
    %269 = vector.broadcast %cst_102 : f32 to vector<4x256xf32>
    %270 = vector.shape_cast %268 : vector<1x256xi1> to vector<1x256xi1>
    %271 = vector.broadcast %270 : vector<1x256xi1> to vector<4x256xi1>
    %272 = arith.select %271, %259, %269 : vector<4x256xi1>, vector<4x256xf32>
    %c24 = arith.constant 24 : index
    %c0_103 = arith.constant 0 : index
    %c0_104 = arith.constant 0 : index
    %273 = vector.load %arg2[%c24, %c0_103, %c0_104] : memref<36x8x1xf32, #tpu.memory_space<vmem>>, vector<1x8x1xf32>
    %274 = vector.shape_cast %273 : vector<1x8x1xf32> to vector<8x1xf32>
    %275 = vector.extract_strided_slice %272 {offsets = [0, 0], sizes = [1, 256], strides = [1, 1]} : vector<4x256xf32> to vector<1x256xf32>
    %276 = vector.broadcast %274 : vector<8x1xf32> to vector<8x256xf32>
    %277 = vector.broadcast %275 : vector<1x256xf32> to vector<8x256xf32>
    %278 = arith.mulf %276, %277 : vector<8x256xf32>
    %279 = arith.addf %257, %278 : vector<8x256xf32>
    %c25 = arith.constant 25 : index
    %c0_105 = arith.constant 0 : index
    %c0_106 = arith.constant 0 : index
    %280 = vector.load %arg2[%c25, %c0_105, %c0_106] : memref<36x8x1xf32, #tpu.memory_space<vmem>>, vector<1x8x1xf32>
    %281 = vector.shape_cast %280 : vector<1x8x1xf32> to vector<8x1xf32>
    %282 = vector.extract_strided_slice %272 {offsets = [1, 0], sizes = [1, 256], strides = [1, 1]} : vector<4x256xf32> to vector<1x256xf32>
    %283 = vector.broadcast %281 : vector<8x1xf32> to vector<8x256xf32>
    %284 = vector.broadcast %282 : vector<1x256xf32> to vector<8x256xf32>
    %285 = arith.mulf %283, %284 : vector<8x256xf32>
    %286 = arith.addf %279, %285 : vector<8x256xf32>
    %c26 = arith.constant 26 : index
    %c0_107 = arith.constant 0 : index
    %c0_108 = arith.constant 0 : index
    %287 = vector.load %arg2[%c26, %c0_107, %c0_108] : memref<36x8x1xf32, #tpu.memory_space<vmem>>, vector<1x8x1xf32>
    %288 = vector.shape_cast %287 : vector<1x8x1xf32> to vector<8x1xf32>
    %289 = vector.extract_strided_slice %272 {offsets = [2, 0], sizes = [1, 256], strides = [1, 1]} : vector<4x256xf32> to vector<1x256xf32>
    %290 = vector.broadcast %288 : vector<8x1xf32> to vector<8x256xf32>
    %291 = vector.broadcast %289 : vector<1x256xf32> to vector<8x256xf32>
    %292 = arith.mulf %290, %291 : vector<8x256xf32>
    %293 = arith.addf %286, %292 : vector<8x256xf32>
    %c27 = arith.constant 27 : index
    %c0_109 = arith.constant 0 : index
    %c0_110 = arith.constant 0 : index
    %294 = vector.load %arg2[%c27, %c0_109, %c0_110] : memref<36x8x1xf32, #tpu.memory_space<vmem>>, vector<1x8x1xf32>
    %295 = vector.shape_cast %294 : vector<1x8x1xf32> to vector<8x1xf32>
    %296 = vector.extract_strided_slice %272 {offsets = [3, 0], sizes = [1, 256], strides = [1, 1]} : vector<4x256xf32> to vector<1x256xf32>
    %297 = vector.broadcast %295 : vector<8x1xf32> to vector<8x256xf32>
    %298 = vector.broadcast %296 : vector<1x256xf32> to vector<8x256xf32>
    %299 = arith.mulf %297, %298 : vector<8x256xf32>
    %300 = arith.addf %293, %299 : vector<8x256xf32>
    %c0_111 = arith.constant 0 : index
    %c0_112 = arith.constant 0 : index
    %c144 = arith.constant 144 : index
    %301 = vector.load %arg5[%c0_111, %c0_112, %c144] : memref<1x4x401xf32, #tpu.memory_space<vmem>>, vector<1x4x256xf32>
    %302 = vector.shape_cast %301 : vector<1x4x256xf32> to vector<4x256xf32>
    %c28 = arith.constant 28 : index
    %c0_113 = arith.constant 0 : index
    %c0_114 = arith.constant 0 : index
    %303 = vector.load %arg2[%c28, %c0_113, %c0_114] : memref<36x8x1xf32, #tpu.memory_space<vmem>>, vector<1x8x1xf32>
    %304 = vector.shape_cast %303 : vector<1x8x1xf32> to vector<8x1xf32>
    %305 = vector.extract_strided_slice %302 {offsets = [0, 0], sizes = [1, 256], strides = [1, 1]} : vector<4x256xf32> to vector<1x256xf32>
    %306 = vector.broadcast %304 : vector<8x1xf32> to vector<8x256xf32>
    %307 = vector.broadcast %305 : vector<1x256xf32> to vector<8x256xf32>
    %308 = arith.mulf %306, %307 : vector<8x256xf32>
    %309 = arith.addf %300, %308 : vector<8x256xf32>
    %c29 = arith.constant 29 : index
    %c0_115 = arith.constant 0 : index
    %c0_116 = arith.constant 0 : index
    %310 = vector.load %arg2[%c29, %c0_115, %c0_116] : memref<36x8x1xf32, #tpu.memory_space<vmem>>, vector<1x8x1xf32>
    %311 = vector.shape_cast %310 : vector<1x8x1xf32> to vector<8x1xf32>
    %312 = vector.extract_strided_slice %302 {offsets = [1, 0], sizes = [1, 256], strides = [1, 1]} : vector<4x256xf32> to vector<1x256xf32>
    %313 = vector.broadcast %311 : vector<8x1xf32> to vector<8x256xf32>
    %314 = vector.broadcast %312 : vector<1x256xf32> to vector<8x256xf32>
    %315 = arith.mulf %313, %314 : vector<8x256xf32>
    %316 = arith.addf %309, %315 : vector<8x256xf32>
    %c30 = arith.constant 30 : index
    %c0_117 = arith.constant 0 : index
    %c0_118 = arith.constant 0 : index
    %317 = vector.load %arg2[%c30, %c0_117, %c0_118] : memref<36x8x1xf32, #tpu.memory_space<vmem>>, vector<1x8x1xf32>
    %318 = vector.shape_cast %317 : vector<1x8x1xf32> to vector<8x1xf32>
    %319 = vector.extract_strided_slice %302 {offsets = [2, 0], sizes = [1, 256], strides = [1, 1]} : vector<4x256xf32> to vector<1x256xf32>
    %320 = vector.broadcast %318 : vector<8x1xf32> to vector<8x256xf32>
    %321 = vector.broadcast %319 : vector<1x256xf32> to vector<8x256xf32>
    %322 = arith.mulf %320, %321 : vector<8x256xf32>
    %323 = arith.addf %316, %322 : vector<8x256xf32>
    %c31 = arith.constant 31 : index
    %c0_119 = arith.constant 0 : index
    %c0_120 = arith.constant 0 : index
    %324 = vector.load %arg2[%c31, %c0_119, %c0_120] : memref<36x8x1xf32, #tpu.memory_space<vmem>>, vector<1x8x1xf32>
    %325 = vector.shape_cast %324 : vector<1x8x1xf32> to vector<8x1xf32>
    %326 = vector.extract_strided_slice %302 {offsets = [3, 0], sizes = [1, 256], strides = [1, 1]} : vector<4x256xf32> to vector<1x256xf32>
    %327 = vector.broadcast %325 : vector<8x1xf32> to vector<8x256xf32>
    %328 = vector.broadcast %326 : vector<1x256xf32> to vector<8x256xf32>
    %329 = arith.mulf %327, %328 : vector<8x256xf32>
    %330 = arith.addf %323, %329 : vector<8x256xf32>
    %c0_121 = arith.constant 0 : index
    %c0_122 = arith.constant 0 : index
    %c145 = arith.constant 145 : index
    %331 = vector.load %arg5[%c0_121, %c0_122, %c145] : memref<1x4x401xf32, #tpu.memory_space<vmem>>, vector<1x4x256xf32>
    %332 = vector.shape_cast %331 : vector<1x4x256xf32> to vector<4x256xf32>
    %c1_i32_123 = arith.constant 1 : i32
    %333 = vector.broadcast %c1_i32_123 : i32 to vector<1x256xi32>
    %334 = arith.addi %22, %333 : vector<1x256xi32>
    %c0_i32_124 = arith.constant 0 : i32
    %335 = vector.broadcast %c0_i32_124 : i32 to vector<1x256xi32>
    %336 = arith.cmpi sge, %334, %335 : vector<1x256xi32>
    %c1_i32_125 = arith.constant 1 : i32
    %337 = vector.broadcast %c1_i32_125 : i32 to vector<1x256xi32>
    %338 = arith.addi %22, %337 : vector<1x256xi32>
    %c16_i32_126 = arith.constant 16 : i32
    %339 = vector.broadcast %c16_i32_126 : i32 to vector<1x256xi32>
    %340 = arith.cmpi slt, %338, %339 : vector<1x256xi32>
    %341 = arith.andi %336, %340 : vector<1x256xi1>
    %cst_127 = arith.constant 0.000000e+00 : f32
    %342 = vector.broadcast %cst_127 : f32 to vector<4x256xf32>
    %343 = vector.shape_cast %341 : vector<1x256xi1> to vector<1x256xi1>
    %344 = vector.broadcast %343 : vector<1x256xi1> to vector<4x256xi1>
    %345 = arith.select %344, %332, %342 : vector<4x256xi1>, vector<4x256xf32>
    %c32 = arith.constant 32 : index
    %c0_128 = arith.constant 0 : index
    %c0_129 = arith.constant 0 : index
    %346 = vector.load %arg2[%c32, %c0_128, %c0_129] : memref<36x8x1xf32, #tpu.memory_space<vmem>>, vector<1x8x1xf32>
    %347 = vector.shape_cast %346 : vector<1x8x1xf32> to vector<8x1xf32>
    %348 = vector.extract_strided_slice %345 {offsets = [0, 0], sizes = [1, 256], strides = [1, 1]} : vector<4x256xf32> to vector<1x256xf32>
    %349 = vector.broadcast %347 : vector<8x1xf32> to vector<8x256xf32>
    %350 = vector.broadcast %348 : vector<1x256xf32> to vector<8x256xf32>
    %351 = arith.mulf %349, %350 : vector<8x256xf32>
    %352 = arith.addf %330, %351 : vector<8x256xf32>
    %c33 = arith.constant 33 : index
    %c0_130 = arith.constant 0 : index
    %c0_131 = arith.constant 0 : index
    %353 = vector.load %arg2[%c33, %c0_130, %c0_131] : memref<36x8x1xf32, #tpu.memory_space<vmem>>, vector<1x8x1xf32>
    %354 = vector.shape_cast %353 : vector<1x8x1xf32> to vector<8x1xf32>
    %355 = vector.extract_strided_slice %345 {offsets = [1, 0], sizes = [1, 256], strides = [1, 1]} : vector<4x256xf32> to vector<1x256xf32>
    %356 = vector.broadcast %354 : vector<8x1xf32> to vector<8x256xf32>
    %357 = vector.broadcast %355 : vector<1x256xf32> to vector<8x256xf32>
    %358 = arith.mulf %356, %357 : vector<8x256xf32>
    %359 = arith.addf %352, %358 : vector<8x256xf32>
    %c34 = arith.constant 34 : index
    %c0_132 = arith.constant 0 : index
    %c0_133 = arith.constant 0 : index
    %360 = vector.load %arg2[%c34, %c0_132, %c0_133] : memref<36x8x1xf32, #tpu.memory_space<vmem>>, vector<1x8x1xf32>
    %361 = vector.shape_cast %360 : vector<1x8x1xf32> to vector<8x1xf32>
    %362 = vector.extract_strided_slice %345 {offsets = [2, 0], sizes = [1, 256], strides = [1, 1]} : vector<4x256xf32> to vector<1x256xf32>
    %363 = vector.broadcast %361 : vector<8x1xf32> to vector<8x256xf32>
    %364 = vector.broadcast %362 : vector<1x256xf32> to vector<8x256xf32>
    %365 = arith.mulf %363, %364 : vector<8x256xf32>
    %366 = arith.addf %359, %365 : vector<8x256xf32>
    %c35 = arith.constant 35 : index
    %c0_134 = arith.constant 0 : index
    %c0_135 = arith.constant 0 : index
    %367 = vector.load %arg2[%c35, %c0_134, %c0_135] : memref<36x8x1xf32, #tpu.memory_space<vmem>>, vector<1x8x1xf32>
    %368 = vector.shape_cast %367 : vector<1x8x1xf32> to vector<8x1xf32>
    %369 = vector.extract_strided_slice %345 {offsets = [3, 0], sizes = [1, 256], strides = [1, 1]} : vector<4x256xf32> to vector<1x256xf32>
    %370 = vector.broadcast %368 : vector<8x1xf32> to vector<8x256xf32>
    %371 = vector.broadcast %369 : vector<1x256xf32> to vector<8x256xf32>
    %372 = arith.mulf %370, %371 : vector<8x256xf32>
    %373 = arith.addf %366, %372 : vector<8x256xf32>
    %cst_136 = arith.constant 0.000000e+00 : f32
    %374 = vector.broadcast %cst_136 : f32 to vector<8x256xf32>
    %375 = arith.maximumf %373, %374 : vector<8x256xf32>
    %c0_137 = arith.constant 0 : index
    %c0_138 = arith.constant 0 : index
    %c0_139 = arith.constant 0 : index
    %376 = vector.load %arg4[%c0_137, %c0_138, %c0_139] : memref<1x8x256xf32, #tpu.memory_space<vmem>>, vector<1x8x256xf32>
    %377 = vector.shape_cast %376 : vector<1x8x256xf32> to vector<8x256xf32>
    %378 = vector.shape_cast %375 : vector<8x256xf32> to vector<1x8x256xf32>
    tpu.vector_store %arg4[%c0_137, %c0_138, %c0_139], %378 {strides = array<i32>} : memref<1x8x256xf32, #tpu.memory_space<vmem>>, vector<1x8x256xf32>,
    return
  }
  func.func @transform_0(%arg0: i32) -> (i32, i32, i32) {
    %c0_i32 = arith.constant 0 : i32
    %c0_i32_0 = arith.constant 0 : i32
    %c0_i32_1 = arith.constant 0 : i32
    return %arg0, %c0_i32, %c0_i32_0 : i32, i32, i32
  }
  func.func @transform_1(%arg0: i32) -> (i32, i32, i32) {
    %c0_i32 = arith.constant 0 : i32
    %c0_i32_0 = arith.constant 0 : i32
    %c0_i32_1 = arith.constant 0 : i32
    %c0_i32_2 = arith.constant 0 : i32
    return %c0_i32, %c0_i32_0, %c0_i32_1 : i32, i32, i32
  }
  func.func @transform_2(%arg0: i32) -> (i32, i32) {
    %c0_i32 = arith.constant 0 : i32
    %c0_i32_0 = arith.constant 0 : i32
    %c0_i32_1 = arith.constant 0 : i32
    return %c0_i32, %c0_i32_0 : i32, i32
  }
  func.func @transform_3(%arg0: i32) -> (i32, i32, i32) {
    %c0_i32 = arith.constant 0 : i32
    %c0_i32_0 = arith.constant 0 : i32
    %c0_i32_1 = arith.constant 0 : i32
    return %arg0, %c0_i32, %c0_i32_0 : i32, i32, i32
  }
}

</mosaic_0001>

<llo_original>
// kernel: tpu_custom_call.1
$region0: #{tpu_custom_call.1}
  #allocation0 [shape = 'u32[]', space=smem, size = 0x4, offset = 0x4, fixed_abs, tag = 'smem constant byte address 0x4 - core index']
  #allocation1 [shape = 'u32[144,128]{1,0:T(1,128)}', space=vmem, size = 0x12000, scoped, tag = 'internal scratch']
  #allocation2 [shape = 'f32[1,4,401]{2,1,0:T(4,128)}', space=vmem, size = 0x2000, scoped, tag = 'scratch operand']
  %s0 = inlined_call_operand.vmem [shape: f32[2,4,256], index: 0, kind: input, shape index: {}]
  %s1 = inlined_call_operand.vmem [shape: f32[36,8,1], index: 1, kind: input, shape index: {}]
  %s2 = inlined_call_operand.vmem [shape: f32[8,1], index: 2, kind: input, shape index: {}]
  %s3 = inlined_call_operand.hbm [shape: f32[2,8,256], index: 3, kind: output, shape index: {}]
  %s4 = sld [smem:[#allocation0]]
  $region45: #{tpu_custom_call.1} parent=0
    _
  %s6 = ssub.s32 1, %s4
  %s7 = scalar_select 0, %s6, %s4
  $region1: #{tpu_custom_call.1} parent=0
    #allocation3 [shape = 'u8[16384]{0}', space=vmem, size = 0x4000, scoped, tag = 'output window, operand 0']
    #allocation4 [shape = 's32[2]{0}', space=sflag, size = 0x8, scoped, tag = 'scoped memory for tpu_custom_call.1']
    %8 = vsyncpa [#allocation4], 0
    %s9 = scalar_lea.sflag [#allocation4], 1
    %10 = vsyncpa %s9, 0
    loop: start=0, step=1, limit=4
    $region2: #{tpu_custom_call.1} parent=1 // loop_pre_header
      _
    $region3: #{tpu_custom_call.1} parent=1 // loop_header
      %s12 = sphi 0, %s16
      %p13 = scmp.ge.s32.totalorder %s12, 4
      %s22 = sphi 0, %s24
      %s25 = sphi 0, %s22
      %s26 = sphi 0, %s25
      %s42 = sphi 0, %s26
      %s46 = sphi 0, %s46
      %s48 = sphi 0, %s46
      %s49 = sphi 0, %s48
      %s63 = sphi 0, %s49
      %s67 = sphi 0, %s67
      %s69 = sphi 0, %s67
      %s70 = sphi 0, %s69
      %s84 = sphi 0, %s70
      %s90 = sphi 0, %s92
      %s93 = sphi 0, %s90
      %s94 = sphi 0, %s93
      %s110 = sphi 0, %s94
    $region4: #{tpu_custom_call.1} parent=1 // loop_header_branch
      %15 = sbr.rel (%p13) target = $region8
    $region5: #{tpu_custom_call.1} parent=1 // loop_body
      %s17 = ssub.s32 %s12, 1
      %s18 = ssub.s32 %s12, 2
      %s19 = sadd.s32 %s12, 1
      %s20 = ssub.s32 %s12, %s19
      %p21 = scmp.eq.s32.totalorder %s20, 0
      %s23 = sadd.s32 %s22, 1
      %s24 = scalar_select %p21, %s22, %s23
      %p27 = pneg %p21
      %p28 = scmp.eq.s32.totalorder %s12, 1
      %p29 = por %p27, %p28
      %p30 = scmp.ne.s32.totalorder %s22, %s25
      %p31 = scmp.eq.s32.totalorder %s12, 0
      %p32 = por %p30, %p31
      %p33 = scmp.ne.s32.totalorder %s22, %s25
      %p34 = scmp.eq.s32.totalorder %s17, 1
      %p35 = por %p33, %p34
      %p36 = scmp.ne.s32.totalorder %s25, %s26
      %p37 = scmp.eq.s32.totalorder %s17, 0
      %p38 = por %p36, %p37
      %p39 = scmp.ne.s32.totalorder %s25, %s26
      %p40 = scmp.eq.s32.totalorder %s18, 1
      %p41 = por %p39, %p40
      %p43 = scmp.ne.s32.totalorder %s26, %s42
      %p44 = scmp.eq.s32.totalorder %s18, 0
      %p45 = por %p43, %p44
      %s47 = sadd.s32 %s46, 1
      %p50 = scmp.eq.s32.totalorder %s12, 1
      %p51 = scmp.ne.s32.totalorder %s46, %s48
      %p52 = scmp.eq.s32.totalorder %s12, 0
      %p53 = por %p51, %p52
      %p54 = scmp.ne.s32.totalorder %s46, %s48
      %p55 = scmp.eq.s32.totalorder %s17, 1
      %p56 = por %p54, %p55
      %p57 = scmp.ne.s32.totalorder %s48, %s49
      %p58 = scmp.eq.s32.totalorder %s17, 0
      %p59 = por %p57, %p58
      %p60 = scmp.ne.s32.totalorder %s48, %s49
      %p61 = scmp.eq.s32.totalorder %s18, 1
      %p62 = por %p60, %p61
      %p64 = scmp.ne.s32.totalorder %s49, %s63
      %p65 = scmp.eq.s32.totalorder %s18, 0
      %p66 = por %p64, %p65
      %s68 = sadd.s32 %s67, 1
      %p71 = scmp.eq.s32.totalorder %s12, 1
      %p72 = scmp.ne.s32.totalorder %s67, %s69
      %p73 = scmp.eq.s32.totalorder %s12, 0
      %p74 = por %p72, %p73
      %p75 = scmp.ne.s32.totalorder %s67, %s69
      %p76 = scmp.eq.s32.totalorder %s17, 1
      %p77 = por %p75, %p76
      %p78 = scmp.ne.s32.totalorder %s69, %s70
      %p79 = scmp.eq.s32.totalorder %s17, 0
      %p80 = por %p78, %p79
      %p81 = scmp.ne.s32.totalorder %s69, %s70
      %p82 = scmp.eq.s32.totalorder %s18, 1
      %p83 = por %p81, %p82
      %p85 = scmp.ne.s32.totalorder %s70, %s84
      %p86 = scmp.eq.s32.totalorder %s18, 0
      %p87 = por %p85, %p86
      %s88 = ssub.s32 %s12, %s19
      %p89 = scmp.eq.s32.totalorder %s88, 0
      %s91 = sadd.s32 %s90, 1
      %s92 = scalar_select %p89, %s90, %s91
      %p95 = pneg %p89
      %p96 = scmp.eq.s32.totalorder %s12, 1
      %p97 = por %p95, %p96
      %p98 = scmp.ne.s32.totalorder %s90, %s93
      %p99 = scmp.eq.s32.totalorder %s12, 0
      %p100 = por %p98, %p99
      %p101 = scmp.ne.s32.totalorder %s90, %s93
      %p102 = scmp.eq.s32.totalorder %s17, 1
      %p103 = por %p101, %p102
      %p104 = scmp.ne.s32.totalorder %s93, %s94
      %p105 = scmp.eq.s32.totalorder %s17, 0
      %p106 = por %p104, %p105
      %p107 = scmp.ne.s32.totalorder %s93, %s94
      %p108 = scmp.eq.s32.totalorder %s18, 1
      %p109 = por %p107, %p108
      %p111 = scmp.ne.s32.totalorder %s94, %s110
      %p112 = scmp.eq.s32.totalorder %s18, 0
      %p113 = por %p111, %p112
      %p114 = scmp.le.s32.totalorder 1, %s12
      %p115 = scmp.lt.s32.totalorder %s12, 3
      %p116 = pnand %p114, %p115
      %p117 = pneg %p116
      // Predicated region
      $region9: #{tpu_custom_call.1} parent=5 // pred_check
        _
      $region10: #{tpu_custom_call.1} parent=5 // pred_check_branch
        %119 = sbr.rel (%p116) target = $region12
      $region11: #{tpu_custom_call.1} parent=5 // pred_region
        %s120 = ssub.s32 %s12, 1
        // Predicated region
        $region13: #{tpu_custom_call.1} parent=11 // pred_check
          %p121 = pneg %p59
        $region14: #{tpu_custom_call.1} parent=11 // pred_check_branch
          %123 = sbr.rel (%p121) target = $region16
        $region15: #{tpu_custom_call.1} parent=11 // pred_region
          _
        $region16: #{tpu_custom_call.1} parent=11 // pred_fallthru
          _
        // Predicated region
        $region17: #{tpu_custom_call.1} parent=11 // pred_check
          %p124 = pneg %p80
        $region18: #{tpu_custom_call.1} parent=11 // pred_check_branch
          %126 = sbr.rel (%p124) target = $region20
        $region19: #{tpu_custom_call.1} parent=11 // pred_region
          _
        $region20: #{tpu_custom_call.1} parent=11 // pred_fallthru
          _
      $region12: #{tpu_custom_call.1} parent=5 // pred_fallthru
        _
      %p127 = scmp.lt.s32.totalorder %s12, 2
      // Predicated region
      $region21: #{tpu_custom_call.1} parent=5 // pred_check
        %p128 = pneg %p127
      $region22: #{tpu_custom_call.1} parent=5 // pred_check_branch
        %130 = sbr.rel (%p128) target = $region24
      $region23: #{tpu_custom_call.1} parent=5 // pred_region
        // Predicated region
        $region25: #{tpu_custom_call.1} parent=23 // pred_check
          %p131 = pneg %p32
        $region26: #{tpu_custom_call.1} parent=23 // pred_check_branch
          %133 = sbr.rel (%p131) target = $region28
        $region27: #{tpu_custom_call.1} parent=23 // pred_region
          %p134 = scmp.lt.s32.totalorder %s12, 1
          %s135 = scalar_select %p134, %s12, 1
          %s136 = smul.addr %s135, 2
          %s137 = smul.addr %s136, 4
          %s138 = scalar_lea.vmem %s0, %s137
        $region28: #{tpu_custom_call.1} parent=23 // pred_fallthru
          _
      $region24: #{tpu_custom_call.1} parent=5 // pred_fallthru
        _
      %p139 = scmp.le.s32.totalorder 1, %s12
      %p140 = scmp.lt.s32.totalorder %s12, 3
      %p141 = pnand %p139, %p140
      %p142 = pneg %p141
      // Predicated region
      $region29: #{tpu_custom_call.1} parent=5 // pred_check
        _
      $region30: #{tpu_custom_call.1} parent=5 // pred_check_branch
        %144 = sbr.rel (%p141) target = $region32
      $region31: #{tpu_custom_call.1} parent=5 // pred_region
        %s145 = ssub.s32 %s12, 1
        %p146 = scmp.lt.s32.totalorder %s17, 1
        %s147 = scalar_select %p146, %s17, 1
        %s148 = smul.addr %s147, 2
        %s149 = smul.addr %s148, 4
        %s150 = scalar_lea.vmem %s0, %s149
        %p151 = pneg %p38
        %p152 = pneg %p35
        %p153 = pneg %p59
        %p154 = pneg %p56
        %p155 = pneg %p80
        %p156 = pneg %p77
        %p157 = pneg %p106
        %p158 = pneg %p103
        %s159 = sand.u32 %s93, 1
        %s160 = scalar_lea.sflag [#allocation4], %s159
        %s161 = sand.u32 %s93, 1
        %s162 = smul.addr %s161, 16
        %s163 = scalar_lea.vmem [#allocation3], %s162
        %p164 = scmp.lt.s32.totalorder %s17, 1
        %s165 = scalar_select %p164, %s17, 1
        %s166 = smul.addr %s165, 2
        %s167 = smul.addr %s166, 4
        %s168 = scalar_lea.vmem %s0, %s167
        %169 = vst [vmem:[#allocation2] sm:$0xf] 0.0
        %vm170 = vcmask 134144
        %171 = vst.msk [vmem:[#allocation2 + $0xc] sm:$0xf] %vm170, 0.0
        %v172 = vld [vmem:[%s168] sm:$0xff]
        %173 = vst [vmem:[#allocation2 + $0x4] sm:$0xff] %v172
        %v174 = vlaneseq
        %v175 = vand.u32 %v174, 127
        %v176 = vadd.s32 %v175, 128
        %vm177 = vcmp.lt.s32.totalorder %v175, 0
        %v178 = vsub.s32 0, %v175
        %v179 = vsel %vm177, %v178, %v175
        %v180 = vshrl.u32 %v179, 4
        %v181 = vand.u32 %v179, 15
        %v182 = vsub.s32 0, %v181
        %v183 = vsel %vm177, %v182, %v181
        %vm184 = vcmp.lt.s32.totalorder %v176, 0
        %v185 = vsub.s32 0, %v176
        %v186 = vsel %vm184, %v185, %v176
        %v187 = vshrl.u32 %v186, 4
        %v188 = vand.u32 %v186, 15
        %v189 = vsub.s32 0, %v188
        %v190 = vsel %vm184, %v189, %v188
        %vm191 = vcmp.ne.s32.totalorder %v183, 0
        %vm192 = vcmp.ne.s32.totalorder %v190, 0
        %vm193 = vcmp.lt.s32.totalorder %v183, 0
        %vm194 = vcmp.lt.s32.totalorder %v190, 0
        %vm195 = vmand %vm193, %vm191
        %vm196 = vmand %vm194, %vm192
        %v197 = vadd.s32 %v183, 16
        %v198 = vadd.s32 %v190, 16
        %v199 = vsel %vm195, %v197, %v183
        %v200 = vsel %vm196, %v198, %v190
        %v201 = vld [vmem:[%s2] sm:$0xff]
        %203 = vset.pattern.permute.xlu0 0
        %204 = vperm.xlu0 %203, %v201
        %v205 = vpop.permute.xlu0 %204
        %v207 = vld [vmem:[#allocation2] sm:$0xff]
        %v208 = vld [vmem:[#allocation2 + $0x8] sm:$0xf]
        %v209 = vadd.s32 %v199, 4294967295
        %v210 = vadd.s32 %v200, 4294967295
        %vm211 = vcmp.ge.s32.totalorder %v209, 0
        %vm212 = vcmp.ge.s32.totalorder %v210, 0
        %vm213 = vcmp.lt.s32.totalorder %v209, 16
        %vm214 = vcmp.lt.s32.totalorder %v210, 16
        %vm215 = vmand %vm211, %vm213
        %vm216 = vmand %vm212, %vm214
        %v217 = vsel %vm215, 1, 0
        %v218 = vsel %vm216, 1, 0
        %vm219 = vcmp.eq.s32.totalorder %v217, 1
        %vm220 = vcmp.eq.s32.totalorder %v218, 1
        %v223 = vcombine.high %v207, %v207
        %224 = vrot.lane.b32.xlu0 %v207, 17
        %v225 = vpop.permute.xlu0 %224
        %226 = vrot.lane.b32.xlu0 %v223, 17
        %v227 = vpop.permute.xlu0 %226
        %228 = vrot.lane.b32.xlu0 %v208, 17
        %v229 = vpop.permute.xlu0 %228
        %vm230 = vcmask 138240
        %v231 = vsel %vm230, %v225, %v227
        %v232 = vsel %vm230, %v227, %v229
        %v235 = vsel %vm219, %v231, 0.0
        %v236 = vsel %vm220, %v232, 0.0
        %v237 = vld [vmem:[%s1] sm:$0xff]
        %239 = vset.pattern.permute.xlu0 0
        %240 = vperm.xlu0 %239, %v237
        %v241 = vpop.permute.xlu0 %240
        %v243 = vlaneseq
        %v244 = vshrl.u32 %v243, 7
        %v245 = vsub.s32 0, %v244
        %v246 = vrot.slane %v235, %v245
        %v247 = vlaneseq
        %v248 = vshrl.u32 %v247, 7
        %v249 = vsub.s32 0, %v248
        %v250 = vrot.slane %v236, %v249
        %v251 = vmul.f32 %v241, %v246
        %v252 = vmul.f32 %v241, %v250
        %v253 = vadd.f32 %v205, %v251
        %v254 = vadd.f32 %v205, %v252
        %s255 = scalar_lea.vmem %s1, 8
        %v256 = vld [vmem:[%s255] sm:$0xff]
        %258 = vset.pattern.permute.xlu0 0
        %259 = vperm.xlu0 %258, %v256
        %v260 = vpop.permute.xlu0 %259
        %v262 = vlaneseq
        %v263 = vshrl.u32 %v262, 7
        %v264 = vsub.s32 1, %v263
        %v265 = vrot.slane %v235, %v264
        %v266 = vlaneseq
        %v267 = vshrl.u32 %v266, 7
        %v268 = vsub.s32 1, %v267
        %v269 = vrot.slane %v236, %v268
        %v270 = vmul.f32 %v260, %v265
        %v271 = vmul.f32 %v260, %v269
        %v272 = vadd.f32 %v253, %v270
        %v273 = vadd.f32 %v254, %v271
        %s274 = scalar_lea.vmem %s1, 16
        %v275 = vld [vmem:[%s274] sm:$0xff]
        %277 = vset.pattern.permute.xlu0 0
        %278 = vperm.xlu0 %277, %v275
        %v279 = vpop.permute.xlu0 %278
        %v281 = vlaneseq
        %v282 = vshrl.u32 %v281, 7
        %v283 = vsub.s32 2, %v282
        %v284 = vrot.slane %v235, %v283
        %v285 = vlaneseq
        %v286 = vshrl.u32 %v285, 7
        %v287 = vsub.s32 2, %v286
        %v288 = vrot.slane %v236, %v287
        %v289 = vmul.f32 %v279, %v284
        %v290 = vmul.f32 %v279, %v288
        %v291 = vadd.f32 %v272, %v289
        %v292 = vadd.f32 %v273, %v290
        %s293 = scalar_lea.vmem %s1, 24
        %v294 = vld [vmem:[%s293] sm:$0xff]
        %296 = vset.pattern.permute.xlu0 0
        %297 = vperm.xlu0 %296, %v294
        %v298 = vpop.permute.xlu0 %297
        %v300 = vlaneseq
        %v301 = vshrl.u32 %v300, 7
        %v302 = vsub.s32 3, %v301
        %v303 = vrot.slane %v235, %v302
        %v304 = vlaneseq
        %v305 = vshrl.u32 %v304, 7
        %v306 = vsub.s32 3, %v305
        %v307 = vrot.slane %v236, %v306
        %v308 = vmul.f32 %v298, %v303
        %v309 = vmul.f32 %v298, %v307
        %v310 = vadd.f32 %v291, %v308
        %v311 = vadd.f32 %v292, %v309
        %v312 = vld [vmem:[#allocation2] sm:$0xff]
        %v313 = vld [vmem:[#allocation2 + $0x8] sm:$0xf]
        %s314 = scalar_lea.vmem %s1, 32
        %v315 = vld [vmem:[%s314] sm:$0xff]
        %317 = vset.pattern.permute.xlu0 0
        %318 = vperm.xlu0 %317, %v315
        %v319 = vpop.permute.xlu0 %318
        %v323 = vlaneseq
        %v324 = vshrl.u32 %v323, 7
        %v325 = vsub.s32 0, %v324
        %v326 = vrot.slane %v312, %v325
        %v327 = vlaneseq
        %v328 = vshrl.u32 %v327, 7
        %v329 = vsub.s32 4, %v328
        %v330 = vrot.slane %v312, %v329
        %v331 = vlaneseq
        %v332 = vshrl.u32 %v331, 7
        %v333 = vsub.s32 0, %v332
        %v334 = vrot.slane %v313, %v333
        %v338 = vlaneseq
        %v339 = vshrl.u32 %v338, 7
        %v340 = vsub.s32 0, %v339
        %v341 = vrot.slane %v326, %v340
        %v342 = vlaneseq
        %v343 = vshrl.u32 %v342, 7
        %v344 = vsub.s32 0, %v343
        %v345 = vrot.slane %v330, %v344
        %v346 = vlaneseq
        %v347 = vshrl.u32 %v346, 7
        %v348 = vsub.s32 0, %v347
        %v349 = vrot.slane %v334, %v348
        %v350 = vmul.f32 %v319, %v341
        %v351 = vmul.f32 %v319, %v345
        %v352 = vmul.f32 %v319, %v349
        %356 = vrot.lane.b32.xlu0 %v350, 16
        %v357 = vpop.permute.xlu0 %356
        %358 = vrot.lane.b32.xlu0 %v351, 16
        %v359 = vpop.permute.xlu0 %358
        %360 = vrot.lane.b32.xlu0 %v352, 16
        %v361 = vpop.permute.xlu0 %360
        %vm362 = vcmask 130048
        %v363 = vsel %vm362, %v357, %v359
        %v364 = vsel %vm362, %v359, %v361
        %v367 = vadd.f32 %v310, %v363
        %v368 = vadd.f32 %v311, %v364
        %s369 = scalar_lea.vmem %s1, 40
        %v370 = vld [vmem:[%s369] sm:$0xff]
        %372 = vset.pattern.permute.xlu0 0
        %373 = vperm.xlu0 %372, %v370
        %v374 = vpop.permute.xlu0 %373
        %v376 = vlaneseq
        %v377 = vshrl.u32 %v376, 7
        %v378 = vsub.s32 1, %v377
        %v379 = vrot.slane %v312, %v378
        %v380 = vlaneseq
        %v381 = vshrl.u32 %v380, 7
        %v382 = vsub.s32 5, %v381
        %v383 = vrot.slane %v312, %v382
        %v384 = vlaneseq
        %v385 = vshrl.u32 %v384, 7
        %v386 = vsub.s32 1, %v385
        %v387 = vrot.slane %v313, %v386
        %v391 = vlaneseq
        %v392 = vshrl.u32 %v391, 7
        %v393 = vsub.s32 1, %v392
        %v394 = vrot.slane %v379, %v393
        %v395 = vlaneseq
        %v396 = vshrl.u32 %v395, 7
        %v397 = vsub.s32 1, %v396
        %v398 = vrot.slane %v383, %v397
        %v399 = vlaneseq
        %v400 = vshrl.u32 %v399, 7
        %v401 = vsub.s32 1, %v400
        %v402 = vrot.slane %v387, %v401
        %v403 = vmul.f32 %v374, %v394
        %v404 = vmul.f32 %v374, %v398
        %v405 = vmul.f32 %v374, %v402
        %409 = vrot.lane.b32.xlu0 %v403, 16
        %v410 = vpop.permute.xlu0 %409
        %411 = vrot.lane.b32.xlu0 %v404, 16
        %v412 = vpop.permute.xlu0 %411
        %413 = vrot.lane.b32.xlu0 %v405, 16
        %v414 = vpop.permute.xlu0 %413
        %v415 = vsel %vm362, %v410, %v412
        %v416 = vsel %vm362, %v412, %v414
        %v419 = vadd.f32 %v367, %v415
        %v420 = vadd.f32 %v368, %v416
        %s421 = scalar_lea.vmem %s1, 48
        %v422 = vld [vmem:[%s421] sm:$0xff]
        %424 = vset.pattern.permute.xlu0 0
        %425 = vperm.xlu0 %424, %v422
        %v426 = vpop.permute.xlu0 %425
        %v428 = vlaneseq
        %v429 = vshrl.u32 %v428, 7
        %v430 = vsub.s32 2, %v429
        %v431 = vrot.slane %v312, %v430
        %v432 = vlaneseq
        %v433 = vshrl.u32 %v432, 7
        %v434 = vsub.s32 6, %v433
        %v435 = vrot.slane %v312, %v434
        %v436 = vlaneseq
        %v437 = vshrl.u32 %v436, 7
        %v438 = vsub.s32 2, %v437
        %v439 = vrot.slane %v313, %v438
        %v443 = vlaneseq
        %v444 = vshrl.u32 %v443, 7
        %v445 = vsub.s32 2, %v444
        %v446 = vrot.slane %v431, %v445
        %v447 = vlaneseq
        %v448 = vshrl.u32 %v447, 7
        %v449 = vsub.s32 2, %v448
        %v450 = vrot.slane %v435, %v449
        %v451 = vlaneseq
        %v452 = vshrl.u32 %v451, 7
        %v453 = vsub.s32 2, %v452
        %v454 = vrot.slane %v439, %v453
        %v455 = vmul.f32 %v426, %v446
        %v456 = vmul.f32 %v426, %v450
        %v457 = vmul.f32 %v426, %v454
        %461 = vrot.lane.b32.xlu0 %v455, 16
        %v462 = vpop.permute.xlu0 %461
        %463 = vrot.lane.b32.xlu0 %v456, 16
        %v464 = vpop.permute.xlu0 %463
        %465 = vrot.lane.b32.xlu0 %v457, 16
        %v466 = vpop.permute.xlu0 %465
        %v467 = vsel %vm362, %v462, %v464
        %v468 = vsel %vm362, %v464, %v466
        %v471 = vadd.f32 %v419, %v467
        %v472 = vadd.f32 %v420, %v468
        %s473 = scalar_lea.vmem %s1, 56
        %v474 = vld [vmem:[%s473] sm:$0xff]
        %476 = vset.pattern.permute.xlu0 0
        %477 = vperm.xlu0 %476, %v474
        %v478 = vpop.permute.xlu0 %477
        %v480 = vlaneseq
        %v481 = vshrl.u32 %v480, 7
        %v482 = vsub.s32 3, %v481
        %v483 = vrot.slane %v312, %v482
        %v484 = vlaneseq
        %v485 = vshrl.u32 %v484, 7
        %v486 = vsub.s32 7, %v485
        %v487 = vrot.slane %v312, %v486
        %v488 = vlaneseq
        %v489 = vshrl.u32 %v488, 7
        %v490 = vsub.s32 3, %v489
        %v491 = vrot.slane %v313, %v490
        %v495 = vlaneseq
        %v496 = vshrl.u32 %v495, 7
        %v497 = vsub.s32 3, %v496
        %v498 = vrot.slane %v483, %v497
        %v499 = vlaneseq
        %v500 = vshrl.u32 %v499, 7
        %v501 = vsub.s32 3, %v500
        %v502 = vrot.slane %v487, %v501
        %v503 = vlaneseq
        %v504 = vshrl.u32 %v503, 7
        %v505 = vsub.s32 3, %v504
        %v506 = vrot.slane %v491, %v505
        %v507 = vmul.f32 %v478, %v498
        %v508 = vmul.f32 %v478, %v502
        %v509 = vmul.f32 %v478, %v506
        %513 = vrot.lane.b32.xlu0 %v507, 16
        %v514 = vpop.permute.xlu0 %513
        %515 = vrot.lane.b32.xlu0 %v508, 16
        %v516 = vpop.permute.xlu0 %515
        %517 = vrot.lane.b32.xlu0 %v509, 16
        %v518 = vpop.permute.xlu0 %517
        %v519 = vsel %vm362, %v514, %v516
        %v520 = vsel %vm362, %v516, %v518
        %v523 = vadd.f32 %v471, %v519
        %v524 = vadd.f32 %v472, %v520
        %v525 = vadd.s32 %v199, 1
        %v526 = vadd.s32 %v200, 1
        %vm527 = vcmp.ge.s32.totalorder %v525, 0
        %vm528 = vcmp.ge.s32.totalorder %v526, 0
        %vm529 = vcmp.lt.s32.totalorder %v525, 16
        %vm530 = vcmp.lt.s32.totalorder %v526, 16
        %vm531 = vmand %vm527, %vm529
        %vm532 = vmand %vm528, %vm530
        %v533 = vsel %vm531, 1, 0
        %v534 = vsel %vm532, 1, 0
        %vm535 = vcmp.eq.s32.totalorder %v533, 1
        %vm536 = vcmp.eq.s32.totalorder %v534, 1
        %v537 = vcombine.high %v312, %v312
        %538 = vrot.lane.b32.xlu0 %v312, 15
        %v539 = vpop.permute.xlu0 %538
        %540 = vrot.lane.b32.xlu0 %v537, 15
        %v541 = vpop.permute.xlu0 %540
        %542 = vrot.lane.b32.xlu0 %v313, 15
        %v543 = vpop.permute.xlu0 %542
        %vm544 = vcmask 121856
        %v545 = vsel %vm544, %v539, %v541
        %v546 = vsel %vm544, %v541, %v543
        %v549 = vsel %vm535, %v545, 0.0
        %v550 = vsel %vm536, %v546, 0.0
        %s551 = scalar_lea.vmem %s1, 64
        %v552 = vld [vmem:[%s551] sm:$0xff]
        %554 = vset.pattern.permute.xlu0 0
        %555 = vperm.xlu0 %554, %v552
        %v556 = vpop.permute.xlu0 %555
        %v558 = vlaneseq
        %v559 = vshrl.u32 %v558, 7
        %v560 = vsub.s32 0, %v559
        %v561 = vrot.slane %v549, %v560
        %v562 = vlaneseq
        %v563 = vshrl.u32 %v562, 7
        %v564 = vsub.s32 0, %v563
        %v565 = vrot.slane %v550, %v564
        %v566 = vmul.f32 %v556, %v561
        %v567 = vmul.f32 %v556, %v565
        %v568 = vadd.f32 %v523, %v566
        %v569 = vadd.f32 %v524, %v567
        %s570 = scalar_lea.vmem %s1, 72
        %v571 = vld [vmem:[%s570] sm:$0xff]
        %573 = vset.pattern.permute.xlu0 0
        %574 = vperm.xlu0 %573, %v571
        %v575 = vpop.permute.xlu0 %574
        %v577 = vlaneseq
        %v578 = vshrl.u32 %v577, 7
        %v579 = vsub.s32 1, %v578
        %v580 = vrot.slane %v549, %v579
        %v581 = vlaneseq
        %v582 = vshrl.u32 %v581, 7
        %v583 = vsub.s32 1, %v582
        %v584 = vrot.slane %v550, %v583
        %v585 = vmul.f32 %v575, %v580
        %v586 = vmul.f32 %v575, %v584
        %v587 = vadd.f32 %v568, %v585
        %v588 = vadd.f32 %v569, %v586
        %s589 = scalar_lea.vmem %s1, 80
        %v590 = vld [vmem:[%s589] sm:$0xff]
        %592 = vset.pattern.permute.xlu0 0
        %593 = vperm.xlu0 %592, %v590
        %v594 = vpop.permute.xlu0 %593
        %v596 = vlaneseq
        %v597 = vshrl.u32 %v596, 7
        %v598 = vsub.s32 2, %v597
        %v599 = vrot.slane %v549, %v598
        %v600 = vlaneseq
        %v601 = vshrl.u32 %v600, 7
        %v602 = vsub.s32 2, %v601
        %v603 = vrot.slane %v550, %v602
        %v604 = vmul.f32 %v594, %v599
        %v605 = vmul.f32 %v594, %v603
        %v606 = vadd.f32 %v587, %v604
        %v607 = vadd.f32 %v588, %v605
        %s608 = scalar_lea.vmem %s1, 88
        %v609 = vld [vmem:[%s608] sm:$0xff]
        %611 = vset.pattern.permute.xlu0 0
        %612 = vperm.xlu0 %611, %v609
        %v613 = vpop.permute.xlu0 %612
        %v615 = vlaneseq
        %v616 = vshrl.u32 %v615, 7
        %v617 = vsub.s32 3, %v616
        %v618 = vrot.slane %v549, %v617
        %v619 = vlaneseq
        %v620 = vshrl.u32 %v619, 7
        %v621 = vsub.s32 3, %v620
        %v622 = vrot.slane %v550, %v621
        %v623 = vmul.f32 %v613, %v618
        %v624 = vmul.f32 %v613, %v622
        %v625 = vadd.f32 %v606, %v623
        %v626 = vadd.f32 %v607, %v624
        %v627 = vld [vmem:[#allocation2] sm:$0xff]
        %v628 = vld [vmem:[#allocation2 + $0x8] sm:$0xf]
        %v631 = vcombine.high %v627, %v627
        %632 = vrot.lane.b32.xlu0 %v627, 1
        %v633 = vpop.permute.xlu0 %632
        %634 = vrot.lane.b32.xlu0 %v631, 1
        %v635 = vpop.permute.xlu0 %634
        %636 = vrot.lane.b32.xlu0 %v628, 1
        %v637 = vpop.permute.xlu0 %636
        %vm638 = vcmask 7168
        %v639 = vsel %vm638, %v633, %v635
        %v640 = vsel %vm638, %v635, %v637
        %v643 = vsel %vm219, %v639, 0.0
        %v644 = vsel %vm220, %v640, 0.0
        %s645 = scalar_lea.vmem %s1, 96
        %v646 = vld [vmem:[%s645] sm:$0xff]
        %648 = vset.pattern.permute.xlu0 0
        %649 = vperm.xlu0 %648, %v646
        %v650 = vpop.permute.xlu0 %649
        %v652 = vlaneseq
        %v653 = vshrl.u32 %v652, 7
        %v654 = vsub.s32 0, %v653
        %v655 = vrot.slane %v643, %v654
        %v656 = vlaneseq
        %v657 = vshrl.u32 %v656, 7
        %v658 = vsub.s32 0, %v657
        %v659 = vrot.slane %v644, %v658
        %v660 = vmul.f32 %v650, %v655
        %v661 = vmul.f32 %v650, %v659
        %v662 = vadd.f32 %v625, %v660
        %v663 = vadd.f32 %v626, %v661
        %s664 = scalar_lea.vmem %s1, 104
        %v665 = vld [vmem:[%s664] sm:$0xff]
        %667 = vset.pattern.permute.xlu0 0
        %668 = vperm.xlu0 %667, %v665
        %v669 = vpop.permute.xlu0 %668
        %v671 = vlaneseq
        %v672 = vshrl.u32 %v671, 7
        %v673 = vsub.s32 1, %v672
        %v674 = vrot.slane %v643, %v673
        %v675 = vlaneseq
        %v676 = vshrl.u32 %v675, 7
        %v677 = vsub.s32 1, %v676
        %v678 = vrot.slane %v644, %v677
        %v679 = vmul.f32 %v669, %v674
        %v680 = vmul.f32 %v669, %v678
        %v681 = vadd.f32 %v662, %v679
        %v682 = vadd.f32 %v663, %v680
        %s683 = scalar_lea.vmem %s1, 112
        %v684 = vld [vmem:[%s683] sm:$0xff]
        %686 = vset.pattern.permute.xlu0 0
        %687 = vperm.xlu0 %686, %v684
        %v688 = vpop.permute.xlu0 %687
        %v690 = vlaneseq
        %v691 = vshrl.u32 %v690, 7
        %v692 = vsub.s32 2, %v691
        %v693 = vrot.slane %v643, %v692
        %v694 = vlaneseq
        %v695 = vshrl.u32 %v694, 7
        %v696 = vsub.s32 2, %v695
        %v697 = vrot.slane %v644, %v696
        %v698 = vmul.f32 %v688, %v693
        %v699 = vmul.f32 %v688, %v697
        %v700 = vadd.f32 %v681, %v698
        %v701 = vadd.f32 %v682, %v699
        %s702 = scalar_lea.vmem %s1, 120
        %v703 = vld [vmem:[%s702] sm:$0xff]
        %705 = vset.pattern.permute.xlu0 0
        %706 = vperm.xlu0 %705, %v703
        %v707 = vpop.permute.xlu0 %706
        %v709 = vlaneseq
        %v710 = vshrl.u32 %v709, 7
        %v711 = vsub.s32 3, %v710
        %v712 = vrot.slane %v643, %v711
        %v713 = vlaneseq
        %v714 = vshrl.u32 %v713, 7
        %v715 = vsub.s32 3, %v714
        %v716 = vrot.slane %v644, %v715
        %v717 = vmul.f32 %v707, %v712
        %v718 = vmul.f32 %v707, %v716
        %v719 = vadd.f32 %v700, %v717
        %v720 = vadd.f32 %v701, %v718
        %v721 = vld [vmem:[#allocation2 + $0x4] sm:$0xff]
        %s722 = scalar_lea.vmem %s1, 128
        %v723 = vld [vmem:[%s722] sm:$0xff]
        %725 = vset.pattern.permute.xlu0 0
        %726 = vperm.xlu0 %725, %v723
        %v727 = vpop.permute.xlu0 %726
        %v730 = vlaneseq
        %v731 = vshrl.u32 %v730, 7
        %v732 = vsub.s32 0, %v731
        %v733 = vrot.slane %v721, %v732
        %v734 = vlaneseq
        %v735 = vshrl.u32 %v734, 7
        %v736 = vsub.s32 4, %v735
        %v737 = vrot.slane %v721, %v736
        %v740 = vlaneseq
        %v741 = vshrl.u32 %v740, 7
        %v742 = vsub.s32 0, %v741
        %v743 = vrot.slane %v733, %v742
        %v744 = vlaneseq
        %v745 = vshrl.u32 %v744, 7
        %v746 = vsub.s32 0, %v745
        %v747 = vrot.slane %v737, %v746
        %v748 = vmul.f32 %v727, %v743
        %v749 = vmul.f32 %v727, %v747
        %v750 = vadd.f32 %v719, %v748
        %v751 = vadd.f32 %v720, %v749
        %s752 = scalar_lea.vmem %s1, 136
        %v753 = vld [vmem:[%s752] sm:$0xff]
        %755 = vset.pattern.permute.xlu0 0
        %756 = vperm.xlu0 %755, %v753
        %v757 = vpop.permute.xlu0 %756
        %v759 = vlaneseq
        %v760 = vshrl.u32 %v759, 7
        %v761 = vsub.s32 1, %v760
        %v762 = vrot.slane %v721, %v761
        %v763 = vlaneseq
        %v764 = vshrl.u32 %v763, 7
        %v765 = vsub.s32 5, %v764
        %v766 = vrot.slane %v721, %v765
        %v769 = vlaneseq
        %v770 = vshrl.u32 %v769, 7
        %v771 = vsub.s32 1, %v770
        %v772 = vrot.slane %v762, %v771
        %v773 = vlaneseq
        %v774 = vshrl.u32 %v773, 7
        %v775 = vsub.s32 1, %v774
        %v776 = vrot.slane %v766, %v775
        %v777 = vmul.f32 %v757, %v772
        %v778 = vmul.f32 %v757, %v776
        %v779 = vadd.f32 %v750, %v777
        %v780 = vadd.f32 %v751, %v778
        %s781 = scalar_lea.vmem %s1, 144
        %v782 = vld [vmem:[%s781] sm:$0xff]
        %784 = vset.pattern.permute.xlu0 0
        %785 = vperm.xlu0 %784, %v782
        %v786 = vpop.permute.xlu0 %785
        %v788 = vlaneseq
        %v789 = vshrl.u32 %v788, 7
        %v790 = vsub.s32 2, %v789
        %v791 = vrot.slane %v721, %v790
        %v792 = vlaneseq
        %v793 = vshrl.u32 %v792, 7
        %v794 = vsub.s32 6, %v793
        %v795 = vrot.slane %v721, %v794
        %v798 = vlaneseq
        %v799 = vshrl.u32 %v798, 7
        %v800 = vsub.s32 2, %v799
        %v801 = vrot.slane %v791, %v800
        %v802 = vlaneseq
        %v803 = vshrl.u32 %v802, 7
        %v804 = vsub.s32 2, %v803
        %v805 = vrot.slane %v795, %v804
        %v806 = vmul.f32 %v786, %v801
        %v807 = vmul.f32 %v786, %v805
        %v808 = vadd.f32 %v779, %v806
        %v809 = vadd.f32 %v780, %v807
        %s810 = scalar_lea.vmem %s1, 152
        %v811 = vld [vmem:[%s810] sm:$0xff]
        %813 = vset.pattern.permute.xlu0 0
        %814 = vperm.xlu0 %813, %v811
        %v815 = vpop.permute.xlu0 %814
        %v817 = vlaneseq
        %v818 = vshrl.u32 %v817, 7
        %v819 = vsub.s32 3, %v818
        %v820 = vrot.slane %v721, %v819
        %v821 = vlaneseq
        %v822 = vshrl.u32 %v821, 7
        %v823 = vsub.s32 7, %v822
        %v824 = vrot.slane %v721, %v823
        %v827 = vlaneseq
        %v828 = vshrl.u32 %v827, 7
        %v829 = vsub.s32 3, %v828
        %v830 = vrot.slane %v820, %v829
        %v831 = vlaneseq
        %v832 = vshrl.u32 %v831, 7
        %v833 = vsub.s32 3, %v832
        %v834 = vrot.slane %v824, %v833
        %v835 = vmul.f32 %v815, %v830
        %v836 = vmul.f32 %v815, %v834
        %v837 = vadd.f32 %v808, %v835
        %v838 = vadd.f32 %v809, %v836
        %v839 = vld [vmem:[#allocation2 + $0x4] sm:$0xff]
        %v840 = vld [vmem:[#allocation2 + $0xc] sm:$0xf]
        %v843 = vcombine.high %v839, %v839
        %844 = vrot.lane.b32.xlu0 %v839, 127
        %v845 = vpop.permute.xlu0 %844
        %846 = vrot.lane.b32.xlu0 %v843, 127
        %v847 = vpop.permute.xlu0 %846
        %848 = vrot.lane.b32.xlu0 %v840, 127
        %v849 = vpop.permute.xlu0 %848
        %vm850 = vcmask 1039360
        %v851 = vsel %vm850, %v845, %v847
        %v852 = vsel %vm850, %v847, %v849
        %v855 = vsel %vm535, %v851, 0.0
        %v856 = vsel %vm536, %v852, 0.0
        %s857 = scalar_lea.vmem %s1, 160
        %v858 = vld [vmem:[%s857] sm:$0xff]
        %860 = vset.pattern.permute.xlu0 0
        %861 = vperm.xlu0 %860, %v858
        %v862 = vpop.permute.xlu0 %861
        %v864 = vlaneseq
        %v865 = vshrl.u32 %v864, 7
        %v866 = vsub.s32 0, %v865
        %v867 = vrot.slane %v855, %v866
        %v868 = vlaneseq
        %v869 = vshrl.u32 %v868, 7
        %v870 = vsub.s32 0, %v869
        %v871 = vrot.slane %v856, %v870
        %v872 = vmul.f32 %v862, %v867
        %v873 = vmul.f32 %v862, %v871
        %v874 = vadd.f32 %v837, %v872
        %v875 = vadd.f32 %v838, %v873
        %s876 = scalar_lea.vmem %s1, 168
        %v877 = vld [vmem:[%s876] sm:$0xff]
        %879 = vset.pattern.permute.xlu0 0
        %880 = vperm.xlu0 %879, %v877
        %v881 = vpop.permute.xlu0 %880
        %v883 = vlaneseq
        %v884 = vshrl.u32 %v883, 7
        %v885 = vsub.s32 1, %v884
        %v886 = vrot.slane %v855, %v885
        %v887 = vlaneseq
        %v888 = vshrl.u32 %v887, 7
        %v889 = vsub.s32 1, %v888
        %v890 = vrot.slane %v856, %v889
        %v891 = vmul.f32 %v881, %v886
        %v892 = vmul.f32 %v881, %v890
        %v893 = vadd.f32 %v874, %v891
        %v894 = vadd.f32 %v875, %v892
        %s895 = scalar_lea.vmem %s1, 176
        %v896 = vld [vmem:[%s895] sm:$0xff]
        %898 = vset.pattern.permute.xlu0 0
        %899 = vperm.xlu0 %898, %v896
        %v900 = vpop.permute.xlu0 %899
        %v902 = vlaneseq
        %v903 = vshrl.u32 %v902, 7
        %v904 = vsub.s32 2, %v903
        %v905 = vrot.slane %v855, %v904
        %v906 = vlaneseq
        %v907 = vshrl.u32 %v906, 7
        %v908 = vsub.s32 2, %v907
        %v909 = vrot.slane %v856, %v908
        %v910 = vmul.f32 %v900, %v905
        %v911 = vmul.f32 %v900, %v909
        %v912 = vadd.f32 %v893, %v910
        %v913 = vadd.f32 %v894, %v911
        %s914 = scalar_lea.vmem %s1, 184
        %v915 = vld [vmem:[%s914] sm:$0xff]
        %917 = vset.pattern.permute.xlu0 0
        %918 = vperm.xlu0 %917, %v915
        %v919 = vpop.permute.xlu0 %918
        %v921 = vlaneseq
        %v922 = vshrl.u32 %v921, 7
        %v923 = vsub.s32 3, %v922
        %v924 = vrot.slane %v855, %v923
        %v925 = vlaneseq
        %v926 = vshrl.u32 %v925, 7
        %v927 = vsub.s32 3, %v926
        %v928 = vrot.slane %v856, %v927
        %v929 = vmul.f32 %v919, %v924
        %v930 = vmul.f32 %v919, %v928
        %v931 = vadd.f32 %v912, %v929
        %v932 = vadd.f32 %v913, %v930
        %v933 = vld [vmem:[#allocation2 + $0x4] sm:$0xff]
        %v934 = vld [vmem:[#allocation2 + $0xc] sm:$0xf]
        %v937 = vcombine.high %v933, %v933
        %938 = vrot.lane.b32.xlu0 %v933, 113
        %v939 = vpop.permute.xlu0 %938
        %940 = vrot.lane.b32.xlu0 %v937, 113
        %v941 = vpop.permute.xlu0 %940
        %942 = vrot.lane.b32.xlu0 %v934, 113
        %v943 = vpop.permute.xlu0 %942
        %vm944 = vcmask 924672
        %v945 = vsel %vm944, %v939, %v941
        %v946 = vsel %vm944, %v941, %v943
        %v949 = vsel %vm219, %v945, 0.0
        %v950 = vsel %vm220, %v946, 0.0
        %s951 = scalar_lea.vmem %s1, 192
        %v952 = vld [vmem:[%s951] sm:$0xff]
        %954 = vset.pattern.permute.xlu0 0
        %955 = vperm.xlu0 %954, %v952
        %v956 = vpop.permute.xlu0 %955
        %v958 = vlaneseq
        %v959 = vshrl.u32 %v958, 7
        %v960 = vsub.s32 0, %v959
        %v961 = vrot.slane %v949, %v960
        %v962 = vlaneseq
        %v963 = vshrl.u32 %v962, 7
        %v964 = vsub.s32 0, %v963
        %v965 = vrot.slane %v950, %v964
        %v966 = vmul.f32 %v956, %v961
        %v967 = vmul.f32 %v956, %v965
        %v968 = vadd.f32 %v931, %v966
        %v969 = vadd.f32 %v932, %v967
        %s970 = scalar_lea.vmem %s1, 200
        %v971 = vld [vmem:[%s970] sm:$0xff]
        %973 = vset.pattern.permute.xlu0 0
        %974 = vperm.xlu0 %973, %v971
        %v975 = vpop.permute.xlu0 %974
        %v977 = vlaneseq
        %v978 = vshrl.u32 %v977, 7
        %v979 = vsub.s32 1, %v978
        %v980 = vrot.slane %v949, %v979
        %v981 = vlaneseq
        %v982 = vshrl.u32 %v981, 7
        %v983 = vsub.s32 1, %v982
        %v984 = vrot.slane %v950, %v983
        %v985 = vmul.f32 %v975, %v980
        %v986 = vmul.f32 %v975, %v984
        %v987 = vadd.f32 %v968, %v985
        %v988 = vadd.f32 %v969, %v986
        %s989 = scalar_lea.vmem %s1, 208
        %v990 = vld [vmem:[%s989] sm:$0xff]
        %992 = vset.pattern.permute.xlu0 0
        %993 = vperm.xlu0 %992, %v990
        %v994 = vpop.permute.xlu0 %993
        %v996 = vlaneseq
        %v997 = vshrl.u32 %v996, 7
        %v998 = vsub.s32 2, %v997
        %v999 = vrot.slane %v949, %v998
        %v1000 = vlaneseq
        %v1001 = vshrl.u32 %v1000, 7
        %v1002 = vsub.s32 2, %v1001
        %v1003 = vrot.slane %v950, %v1002
        %v1004 = vmul.f32 %v994, %v999
        %v1005 = vmul.f32 %v994, %v1003
        %v1006 = vadd.f32 %v987, %v1004
        %v1007 = vadd.f32 %v988, %v1005
        %s1008 = scalar_lea.vmem %s1, 216
        %v1009 = vld [vmem:[%s1008] sm:$0xff]
        %1011 = vset.pattern.permute.xlu0 0
        %1012 = vperm.xlu0 %1011, %v1009
        %v1013 = vpop.permute.xlu0 %1012
        %v1015 = vlaneseq
        %v1016 = vshrl.u32 %v1015, 7
        %v1017 = vsub.s32 3, %v1016
        %v1018 = vrot.slane %v949, %v1017
        %v1019 = vlaneseq
        %v1020 = vshrl.u32 %v1019, 7
        %v1021 = vsub.s32 3, %v1020
        %v1022 = vrot.slane %v950, %v1021
        %v1023 = vmul.f32 %v1013, %v1018
        %v1024 = vmul.f32 %v1013, %v1022
        %v1025 = vadd.f32 %v1006, %v1023
        %v1026 = vadd.f32 %v1007, %v1024
        %v1027 = vld [vmem:[#allocation2 + $0x4] sm:$0xff]
        %v1028 = vld [vmem:[#allocation2 + $0xc] sm:$0xf]
        %s1029 = scalar_lea.vmem %s1, 224
        %v1030 = vld [vmem:[%s1029] sm:$0xff]
        %1032 = vset.pattern.permute.xlu0 0
        %1033 = vperm.xlu0 %1032, %v1030
        %v1034 = vpop.permute.xlu0 %1033
        %v1038 = vlaneseq
        %v1039 = vshrl.u32 %v1038, 7
        %v1040 = vsub.s32 0, %v1039
        %v1041 = vrot.slane %v1027, %v1040
        %v1042 = vlaneseq
        %v1043 = vshrl.u32 %v1042, 7
        %v1044 = vsub.s32 4, %v1043
        %v1045 = vrot.slane %v1027, %v1044
        %v1046 = vlaneseq
        %v1047 = vshrl.u32 %v1046, 7
        %v1048 = vsub.s32 0, %v1047
        %v1049 = vrot.slane %v1028, %v1048
        %v1053 = vlaneseq
        %v1054 = vshrl.u32 %v1053, 7
        %v1055 = vsub.s32 0, %v1054
        %v1056 = vrot.slane %v1041, %v1055
        %v1057 = vlaneseq
        %v1058 = vshrl.u32 %v1057, 7
        %v1059 = vsub.s32 0, %v1058
        %v1060 = vrot.slane %v1045, %v1059
        %v1061 = vlaneseq
        %v1062 = vshrl.u32 %v1061, 7
        %v1063 = vsub.s32 0, %v1062
        %v1064 = vrot.slane %v1049, %v1063
        %v1065 = vmul.f32 %v1034, %v1056
        %v1066 = vmul.f32 %v1034, %v1060
        %v1067 = vmul.f32 %v1034, %v1064
        %1071 = vrot.lane.b32.xlu0 %v1065, 112
        %v1072 = vpop.permute.xlu0 %1071
        %1073 = vrot.lane.b32.xlu0 %v1066, 112
        %v1074 = vpop.permute.xlu0 %1073
        %1075 = vrot.lane.b32.xlu0 %v1067, 112
        %v1076 = vpop.permute.xlu0 %1075
        %vm1077 = vcmask 916480
        %v1078 = vsel %vm1077, %v1072, %v1074
        %v1079 = vsel %vm1077, %v1074, %v1076
        %v1082 = vadd.f32 %v1025, %v1078
        %v1083 = vadd.f32 %v1026, %v1079
        %s1084 = scalar_lea.vmem %s1, 232
        %v1085 = vld [vmem:[%s1084] sm:$0xff]
        %1087 = vset.pattern.permute.xlu0 0
        %1088 = vperm.xlu0 %1087, %v1085
        %v1089 = vpop.permute.xlu0 %1088
        %v1091 = vlaneseq
        %v1092 = vshrl.u32 %v1091, 7
        %v1093 = vsub.s32 1, %v1092
        %v1094 = vrot.slane %v1027, %v1093
        %v1095 = vlaneseq
        %v1096 = vshrl.u32 %v1095, 7
        %v1097 = vsub.s32 5, %v1096
        %v1098 = vrot.slane %v1027, %v1097
        %v1099 = vlaneseq
        %v1100 = vshrl.u32 %v1099, 7
        %v1101 = vsub.s32 1, %v1100
        %v1102 = vrot.slane %v1028, %v1101
        %v1106 = vlaneseq
        %v1107 = vshrl.u32 %v1106, 7
        %v1108 = vsub.s32 1, %v1107
        %v1109 = vrot.slane %v1094, %v1108
        %v1110 = vlaneseq
        %v1111 = vshrl.u32 %v1110, 7
        %v1112 = vsub.s32 1, %v1111
        %v1113 = vrot.slane %v1098, %v1112
        %v1114 = vlaneseq
        %v1115 = vshrl.u32 %v1114, 7
        %v1116 = vsub.s32 1, %v1115
        %v1117 = vrot.slane %v1102, %v1116
        %v1118 = vmul.f32 %v1089, %v1109
        %v1119 = vmul.f32 %v1089, %v1113
        %v1120 = vmul.f32 %v1089, %v1117
        %1124 = vrot.lane.b32.xlu0 %v1118, 112
        %v1125 = vpop.permute.xlu0 %1124
        %1126 = vrot.lane.b32.xlu0 %v1119, 112
        %v1127 = vpop.permute.xlu0 %1126
        %1128 = vrot.lane.b32.xlu0 %v1120, 112
        %v1129 = vpop.permute.xlu0 %1128
        %v1130 = vsel %vm1077, %v1125, %v1127
        %v1131 = vsel %vm1077, %v1127, %v1129
        %v1134 = vadd.f32 %v1082, %v1130
        %v1135 = vadd.f32 %v1083, %v1131
        %s1136 = scalar_lea.vmem %s1, 240
        %v1137 = vld [vmem:[%s1136] sm:$0xff]
        %1139 = vset.pattern.permute.xlu0 0
        %1140 = vperm.xlu0 %1139, %v1137
        %v1141 = vpop.permute.xlu0 %1140
        %v1143 = vlaneseq
        %v1144 = vshrl.u32 %v1143, 7
        %v1145 = vsub.s32 2, %v1144
        %v1146 = vrot.slane %v1027, %v1145
        %v1147 = vlaneseq
        %v1148 = vshrl.u32 %v1147, 7
        %v1149 = vsub.s32 6, %v1148
        %v1150 = vrot.slane %v1027, %v1149
        %v1151 = vlaneseq
        %v1152 = vshrl.u32 %v1151, 7
        %v1153 = vsub.s32 2, %v1152
        %v1154 = vrot.slane %v1028, %v1153
        %v1158 = vlaneseq
        %v1159 = vshrl.u32 %v1158, 7
        %v1160 = vsub.s32 2, %v1159
        %v1161 = vrot.slane %v1146, %v1160
        %v1162 = vlaneseq
        %v1163 = vshrl.u32 %v1162, 7
        %v1164 = vsub.s32 2, %v1163
        %v1165 = vrot.slane %v1150, %v1164
        %v1166 = vlaneseq
        %v1167 = vshrl.u32 %v1166, 7
        %v1168 = vsub.s32 2, %v1167
        %v1169 = vrot.slane %v1154, %v1168
        %v1170 = vmul.f32 %v1141, %v1161
        %v1171 = vmul.f32 %v1141, %v1165
        %v1172 = vmul.f32 %v1141, %v1169
        %1176 = vrot.lane.b32.xlu0 %v1170, 112
        %v1177 = vpop.permute.xlu0 %1176
        %1178 = vrot.lane.b32.xlu0 %v1171, 112
        %v1179 = vpop.permute.xlu0 %1178
        %1180 = vrot.lane.b32.xlu0 %v1172, 112
        %v1181 = vpop.permute.xlu0 %1180
        %v1182 = vsel %vm1077, %v1177, %v1179
        %v1183 = vsel %vm1077, %v1179, %v1181
        %v1186 = vadd.f32 %v1134, %v1182
        %v1187 = vadd.f32 %v1135, %v1183
        %s1188 = scalar_lea.vmem %s1, 248
        %v1189 = vld [vmem:[%s1188] sm:$0xff]
        %1191 = vset.pattern.permute.xlu0 0
        %1192 = vperm.xlu0 %1191, %v1189
        %v1193 = vpop.permute.xlu0 %1192
        %v1195 = vlaneseq
        %v1196 = vshrl.u32 %v1195, 7
        %v1197 = vsub.s32 3, %v1196
        %v1198 = vrot.slane %v1027, %v1197
        %v1199 = vlaneseq
        %v1200 = vshrl.u32 %v1199, 7
        %v1201 = vsub.s32 7, %v1200
        %v1202 = vrot.slane %v1027, %v1201
        %v1203 = vlaneseq
        %v1204 = vshrl.u32 %v1203, 7
        %v1205 = vsub.s32 3, %v1204
        %v1206 = vrot.slane %v1028, %v1205
        %v1210 = vlaneseq
        %v1211 = vshrl.u32 %v1210, 7
        %v1212 = vsub.s32 3, %v1211
        %v1213 = vrot.slane %v1198, %v1212
        %v1214 = vlaneseq
        %v1215 = vshrl.u32 %v1214, 7
        %v1216 = vsub.s32 3, %v1215
        %v1217 = vrot.slane %v1202, %v1216
        %v1218 = vlaneseq
        %v1219 = vshrl.u32 %v1218, 7
        %v1220 = vsub.s32 3, %v1219
        %v1221 = vrot.slane %v1206, %v1220
        %v1222 = vmul.f32 %v1193, %v1213
        %v1223 = vmul.f32 %v1193, %v1217
        %v1224 = vmul.f32 %v1193, %v1221
        %1228 = vrot.lane.b32.xlu0 %v1222, 112
        %v1229 = vpop.permute.xlu0 %1228
        %1230 = vrot.lane.b32.xlu0 %v1223, 112
        %v1231 = vpop.permute.xlu0 %1230
        %1232 = vrot.lane.b32.xlu0 %v1224, 112
        %v1233 = vpop.permute.xlu0 %1232
        %v1234 = vsel %vm1077, %v1229, %v1231
        %v1235 = vsel %vm1077, %v1231, %v1233
        %v1238 = vadd.f32 %v1186, %v1234
        %v1239 = vadd.f32 %v1187, %v1235
        %v1240 = vcombine.high %v1027, %v1027
        %1241 = vrot.lane.b32.xlu0 %v1027, 111
        %v1242 = vpop.permute.xlu0 %1241
        %1243 = vrot.lane.b32.xlu0 %v1240, 111
        %v1244 = vpop.permute.xlu0 %1243
        %1245 = vrot.lane.b32.xlu0 %v1028, 111
        %v1246 = vpop.permute.xlu0 %1245
        %vm1247 = vcmask 908288
        %v1248 = vsel %vm1247, %v1242, %v1244
        %v1249 = vsel %vm1247, %v1244, %v1246
        %v1252 = vsel %vm535, %v1248, 0.0
        %v1253 = vsel %vm536, %v1249, 0.0
        %s1254 = scalar_lea.vmem %s1, 256
        %v1255 = vld [vmem:[%s1254] sm:$0xff]
        %1257 = vset.pattern.permute.xlu0 0
        %1258 = vperm.xlu0 %1257, %v1255
        %v1259 = vpop.permute.xlu0 %1258
        %v1261 = vlaneseq
        %v1262 = vshrl.u32 %v1261, 7
        %v1263 = vsub.s32 0, %v1262
        %v1264 = vrot.slane %v1252, %v1263
        %v1265 = vlaneseq
        %v1266 = vshrl.u32 %v1265, 7
        %v1267 = vsub.s32 0, %v1266
        %v1268 = vrot.slane %v1253, %v1267
        %v1269 = vmul.f32 %v1259, %v1264
        %v1270 = vmul.f32 %v1259, %v1268
        %v1271 = vadd.f32 %v1238, %v1269
        %v1272 = vadd.f32 %v1239, %v1270
        %s1273 = scalar_lea.vmem %s1, 264
        %v1274 = vld [vmem:[%s1273] sm:$0xff]
        %1276 = vset.pattern.permute.xlu0 0
        %1277 = vperm.xlu0 %1276, %v1274
        %v1278 = vpop.permute.xlu0 %1277
        %v1280 = vlaneseq
        %v1281 = vshrl.u32 %v1280, 7
        %v1282 = vsub.s32 1, %v1281
        %v1283 = vrot.slane %v1252, %v1282
        %v1284 = vlaneseq
        %v1285 = vshrl.u32 %v1284, 7
        %v1286 = vsub.s32 1, %v1285
        %v1287 = vrot.slane %v1253, %v1286
        %v1288 = vmul.f32 %v1278, %v1283
        %v1289 = vmul.f32 %v1278, %v1287
        %v1290 = vadd.f32 %v1271, %v1288
        %v1291 = vadd.f32 %v1272, %v1289
        %s1292 = scalar_lea.vmem %s1, 272
        %v1293 = vld [vmem:[%s1292] sm:$0xff]
        %1295 = vset.pattern.permute.xlu0 0
        %1296 = vperm.xlu0 %1295, %v1293
        %v1297 = vpop.permute.xlu0 %1296
        %v1299 = vlaneseq
        %v1300 = vshrl.u32 %v1299, 7
        %v1301 = vsub.s32 2, %v1300
        %v1302 = vrot.slane %v1252, %v1301
        %v1303 = vlaneseq
        %v1304 = vshrl.u32 %v1303, 7
        %v1305 = vsub.s32 2, %v1304
        %v1306 = vrot.slane %v1253, %v1305
        %v1307 = vmul.f32 %v1297, %v1302
        %v1308 = vmul.f32 %v1297, %v1306
        %v1309 = vadd.f32 %v1290, %v1307
        %v1310 = vadd.f32 %v1291, %v1308
        %s1311 = scalar_lea.vmem %s1, 280
        %v1312 = vld [vmem:[%s1311] sm:$0xff]
        %1314 = vset.pattern.permute.xlu0 0
        %1315 = vperm.xlu0 %1314, %v1312
        %v1316 = vpop.permute.xlu0 %1315
        %v1318 = vlaneseq
        %v1319 = vshrl.u32 %v1318, 7
        %v1320 = vsub.s32 3, %v1319
        %v1321 = vrot.slane %v1252, %v1320
        %v1322 = vlaneseq
        %v1323 = vshrl.u32 %v1322, 7
        %v1324 = vsub.s32 3, %v1323
        %v1325 = vrot.slane %v1253, %v1324
        %v1326 = vmul.f32 %v1316, %v1321
        %v1327 = vmul.f32 %v1316, %v1325
        %v1328 = vadd.f32 %v1309, %v1326
        %v1329 = vadd.f32 %v1310, %v1327
        %v1330 = vmax.f32 %v1328, 0.0
        %v1331 = vmax.f32 %v1329, 0.0
        %1332 = vst [vmem:[%s163] sm:$0xff] %v1330
        %1333 = vst [vmem:[%s163 + $0x8] sm:$0xff] %v1331
        %s1334 = sand.u32 %s93, 1
        %s1335 = scalar_lea.sflag [#allocation4], %s1334
        %s1336 = sand.u32 %s93, 1
        %s1337 = smul.addr %s1336, 16
        %s1338 = scalar_lea.vmem [#allocation3], %s1337
        // Predicated region
        $region33: #{tpu_custom_call.1} parent=31 // pred_check
          %p1339 = pneg %p103
        $region34: #{tpu_custom_call.1} parent=31 // pred_check_branch
          %1341 = sbr.rel (%p1339) target = $region36
        $region35: #{tpu_custom_call.1} parent=31 // pred_region
          %s1343 = ssub.s32 256, 256
          %1344 = vsyncadd %s1335, %s1343
          %s1345 = smul.addr %s17, 2
          %s1346 = smul.addr %s1345, 128
          %s1347 = scalar_lea.hbm %s3, %s1346
          %s1349 = sshll.u32 %s1338, 4
          %s1350 = int_to_ptr.vmem [resolvable:$true] %s1349
          %1352 = dma.vmem_to_hbm [thread:$0]  %s1350, 256, %s1347, %s1335
        $region36: #{tpu_custom_call.1} parent=31 // pred_fallthru
          _
      $region32: #{tpu_custom_call.1} parent=5 // pred_fallthru
        _
      %p1353 = scmp.le.s32.totalorder 2, %s12
      // Predicated region
      $region37: #{tpu_custom_call.1} parent=5 // pred_check
        %p1354 = pneg %p1353
      $region38: #{tpu_custom_call.1} parent=5 // pred_check_branch
        %1356 = sbr.rel (%p1354) target = $region40
      $region39: #{tpu_custom_call.1} parent=5 // pred_region
        %s1357 = ssub.s32 %s12, 2
        // Predicated region
        $region41: #{tpu_custom_call.1} parent=39 // pred_check
          %p1358 = pneg %p109
        $region42: #{tpu_custom_call.1} parent=39 // pred_check_branch
          %1360 = sbr.rel (%p1358) target = $region44
        $region43: #{tpu_custom_call.1} parent=39 // pred_region
          %s1361 = sand.u32 %s94, 1
          %s1362 = scalar_lea.sflag [#allocation4], %s1361
          %s1363 = sand.u32 %s94, 1
          %s1364 = smul.addr %s1363, 16
          %s1365 = scalar_lea.vmem [#allocation3], %s1364
          %1366 = dma.done %s1362, 256
        $region44: #{tpu_custom_call.1} parent=39 // pred_fallthru
          _
      $region40: #{tpu_custom_call.1} parent=5 // pred_fallthru
        _
    $region6: #{tpu_custom_call.1} parent=1 // loop_footer
      %s16 = sadd.s32 1, %s12
    $region7: #{tpu_custom_call.1} parent=1 // loop_footer_branch
      %11 = sbr.rel target = $region3
    $region8: #{tpu_custom_call.1} parent=1 // loop_exit
      _
    %1367 = vsyncpa [#allocation4], 1
    %s1368 = scalar_lea.sflag [#allocation4], 1
    %1369 = vsyncpa %s1368, 1

</llo_original>
